<compile_context>
chip_gen: v5e
topology: v5e:2x2
jax: 0.10.0
libtpu: 0.0.40
codegen_flags: <defaults>
</compile_context>

<pallas_src>
import functools
import math

import jax
import jax.numpy as jnp
from jax.experimental import pallas as pl
from jax.experimental.pallas import tpu as pltpu

# ----------------------------- config -----------------------------
VOCAB = 128
HIDDEN = 32
N_LAYERS = 2
N_HEADS = 2
HEAD_DIM = HIDDEN // N_HEADS
FFN = 64
MAX_POS = 64
TYPE_VOCAB = 2
LN_EPS = 1e-12

BATCH = 2
SEQ = 8

_SLAB_ROWS_PER_LAYER = 8  # bqkv, bo, ln1_g, ln1_b, bi, bo2, ln2_g, ln2_b


# ----------------------------- in-kernel helpers -----------------------------
def _layernorm(x, g, b, eps):
    mean = jnp.mean(x, axis=-1, keepdims=True)
    var = jnp.mean(jnp.square(x - mean), axis=-1, keepdims=True)
    return (x - mean) * jax.lax.rsqrt(var + eps) * g + b


def _gelu(x):
    # TODO(synk): HF BERT uses exact erf GELU; tanh approximation used here (erf has no
    # guaranteed Mosaic lowering).
    return 0.5 * x * (1.0 + jnp.tanh(0.7978845608028654 * (x + 0.044715 * x * x * x)))


# ----------------------------- fused kernel -----------------------------
def _bert_fused_kernel(
    x_ref,        # (S, H)        f32   summed embeddings for this batch
    mask_ref,     # (1, 1, S)     f32   additive attention bias for this batch
    wqkv_ref,     # (L, H, 3H)    bf16
    wo_ref,       # (L, H, H)     bf16
    wi_ref,       # (L, H, FFN)   bf16
    wo2_ref,      # (L, FFN, H)   bf16
    lm_w_ref,     # (H, VOCAB)    bf16
    slab_ref,     # (R, 128)      f32   coalesced bias / LN params
    out_ref,      # (S, VOCAB)    f32
    ctx_ref,      # (S, H)        f32   VMEM scratch: per-head attention context
    *, n_heads, eps,
):
    seq, hidden = x_ref.shape
    n_layers = wqkv_ref.shape[0]
    ffn = wi_ref.shape[-1]
    vocab = lm_w_ref.shape[-1]
    head_dim = hidden // n_heads
    scale = 1.0 / math.sqrt(head_dim)

    def vec(row, width):
        # One lane-dense row of the coalesced parameter slab, (1, width) f32.
        return slab_ref[row:row + 1, 0:width]

    # Embedding LayerNorm (no zero-residual add).
    x = _layernorm(x_ref[...], vec(0, hidden), vec(1, hidden), eps)      # (S, H) f32
    bias = mask_ref[0]                                                   # (1, S) additive

    for l in range(n_layers):                                            # unrolled (L=2)
        base = 2 + l * _SLAB_ROWS_PER_LAYER

        # ---- fused QKV projection: one bf16 MXU pass with N = 3*H ----
        qkv = jnp.dot(x.astype(jnp.bfloat16), wqkv_ref[l],
                      preferred_element_type=jnp.float32) + vec(base + 0, 3 * hidden)

        # ---- per-head attention; context written into VMEM scratch (no concats) ----
        for h in range(n_heads):
            c0 = h * head_dim
            q = qkv[:, c0:c0 + head_dim]                                  # (S, dh)
            k = qkv[:, hidden + c0:hidden + c0 + head_dim]                # (S, dh)
            v = qkv[:, 2 * hidden + c0:2 * hidden + c0 + head_dim]        # (S, dh)
            s = jax.lax.dot_general(
                q, k, (((1,), (1,)), ((), ())),
                preferred_element_type=jnp.float32) * scale + bias        # (S, S)
            m = jnp.max(s, axis=-1, keepdims=True)
            e = jnp.exp(s - m)
            p = e * pl.reciprocal(jnp.sum(e, axis=-1, keepdims=True), approx=True)
            ctx_ref[:, c0:c0 + head_dim] = jnp.dot(
                p, v, preferred_element_type=jnp.float32)                 # (S, dh)

        # ---- attention output projection + residual LN ----
        attn_out = jnp.dot(ctx_ref[...].astype(jnp.bfloat16), wo_ref[l],
                           preferred_element_type=jnp.float32) + vec(base + 1, hidden)
        x = _layernorm(attn_out + x, vec(base + 2, hidden), vec(base + 3, hidden), eps)

        # ---- FFN + residual LN ----
        h_mid = _gelu(jnp.dot(x.astype(jnp.bfloat16), wi_ref[l],
                              preferred_element_type=jnp.float32) + vec(base + 4, ffn))
        y = jnp.dot(h_mid.astype(jnp.bfloat16), wo2_ref[l],
                    preferred_element_type=jnp.float32) + vec(base + 5, hidden)
        x = _layernorm(y + x, vec(base + 6, hidden), vec(base + 7, hidden), eps)

    # ---- lm_head: lane-dense (S, VOCAB=128) output block ----
    logits = jnp.dot(x.astype(jnp.bfloat16), lm_w_ref[...],
                     preferred_element_type=jnp.float32) \
        + vec(2 + _SLAB_ROWS_PER_LAYER * n_layers, vocab)
    out_ref[...] = logits.astype(out_ref.dtype)


def bert_forward_fused(packed, x_emb, mask_bias):
    """x_emb: (B*S, H) summed embeddings (f32); mask_bias: (B, 1, S) additive mask (f32)."""
    M, H = x_emb.shape
    B = mask_bias.shape[0]
    S = M // B

    operands = (
        x_emb, mask_bias,
        packed["wqkv"], packed["wo"], packed["wi"], packed["wo2"],
        packed["lm_w"], packed["slab"],
    )

    def const_spec(arr):
        nd = arr.ndim
        return pl.BlockSpec(arr.shape, lambda b, _nd=nd: (0,) * _nd)   # resident weights

    in_specs = [
        pl.BlockSpec((S, H), lambda b: (b, 0)),          # per-batch activation block
        pl.BlockSpec((1, 1, S), lambda b: (b, 0, 0)),    # per-batch attention bias
    ] + [const_spec(op) for op in operands[2:]]

    kernel = functools.partial(_bert_fused_kernel, n_heads=N_HEADS, eps=LN_EPS)

    return pl.pallas_call(
        kernel,
        out_shape=jax.ShapeDtypeStruct((M, VOCAB), jnp.float32),
        grid=(B,),
        in_specs=in_specs,
        out_specs=pl.BlockSpec((S, VOCAB), lambda b: (b, 0)),
        scratch_shapes=[pltpu.VMEM((S, H), jnp.float32)],
        compiler_params=pltpu.CompilerParams(
            dimension_semantics=("parallel",),           # batches spread over TCs (v7x)
            vmem_limit_bytes=32 * 1024 * 1024,
        ),
    )(*operands)


# ----------------------------- parameters -----------------------------
def init_params(key):
    def normal(k, shape):
        return 0.02 * jax.random.normal(k, shape, dtype=jnp.float32)

    keys = iter(jax.random.split(key, 8 + N_LAYERS * 8))
    p = {
        "word_emb": normal(next(keys), (VOCAB, HIDDEN)),
        "pos_emb": normal(next(keys), (MAX_POS, HIDDEN)),
        "type_emb": normal(next(keys), (TYPE_VOCAB, HIDDEN)),
        "emb_ln_g": jnp.ones((HIDDEN,), jnp.float32),
        "emb_ln_b": jnp.zeros((HIDDEN,), jnp.float32),
        "lm_w": normal(next(keys), (HIDDEN, VOCAB)),
        "lm_b": jnp.zeros((VOCAB,), jnp.float32),
        "layers": [],
    }
    for _ in range(N_LAYERS):
        lp = {
            "wq": normal(next(keys), (HIDDEN, HIDDEN)), "bq": jnp.zeros((HIDDEN,), jnp.float32),
            "wk": normal(next(keys), (HIDDEN, HIDDEN)), "bk": jnp.zeros((HIDDEN,), jnp.float32),
            "wv": normal(next(keys), (HIDDEN, HIDDEN)), "bv": jnp.zeros((HIDDEN,), jnp.float32),
            "wo": normal(next(keys), (HIDDEN, HIDDEN)), "bo": jnp.zeros((HIDDEN,), jnp.float32),
            "ln1_g": jnp.ones((HIDDEN,), jnp.float32), "ln1_b": jnp.zeros((HIDDEN,), jnp.float32),
            "wi": normal(next(keys), (HIDDEN, FFN)), "bi": jnp.zeros((FFN,), jnp.float32),
            "wo2": normal(next(keys), (FFN, HIDDEN)), "bo2": jnp.zeros((HIDDEN,), jnp.float32),
            "ln2_g": jnp.ones((HIDDEN,), jnp.float32), "ln2_b": jnp.zeros((HIDDEN,), jnp.float32),
        }
        p["layers"].append(lp)
    return p


def pack_params(params):
    """Pack weights ONCE at init: stack per-layer weights (bf16), fuse QKV, and coalesce
    every small bias / LayerNorm vector into a single lane-dense (R, 128) f32 slab."""
    layers = params["layers"]

    def pad_row(v):
        v = jnp.asarray(v, jnp.float32).reshape(-1)
        return jnp.pad(v, (0, 128 - v.shape[0]))

    rows = [pad_row(params["emb_ln_g"]), pad_row(params["emb_ln_b"])]
    for lp in layers:
        rows.append(pad_row(jnp.concatenate([lp["bq"], lp["bk"], lp["bv"]])))   # bqkv
        rows.append(pad_row(lp["bo"]))
        rows.append(pad_row(lp["ln1_g"]))
        rows.append(pad_row(lp["ln1_b"]))
        rows.append(pad_row(lp["bi"]))
        rows.append(pad_row(lp["bo2"]))
        rows.append(pad_row(lp["ln2_g"]))
        rows.append(pad_row(lp["ln2_b"]))
    rows.append(pad_row(params["lm_b"]))
    slab = jnp.stack(rows)
    slab = jnp.pad(slab, (((-slab.shape[0]) % 8, 0)[::-1], (0, 0)))             # sublane pad

    packed = {
        # embedding tables stay f32, used by the JAX-side gather
        "word_emb": params["word_emb"],
        "pos_emb": params["pos_emb"],
        "type_emb": params["type_emb"],
        # bf16 MXU weights (f32 accumulation inside the kernel)
        "wqkv": jnp.stack([jnp.concatenate([lp["wq"], lp["wk"], lp["wv"]], axis=1)
                           for lp in layers]).astype(jnp.bfloat16),             # (L, H, 3H)
        "wo": jnp.stack([lp["wo"] for lp in layers]).astype(jnp.bfloat16),      # (L, H, H)
        "wi": jnp.stack([lp["wi"] for lp in layers]).astype(jnp.bfloat16),      # (L, H, FFN)
        "wo2": jnp.stack([lp["wo2"] for lp in layers]).astype(jnp.bfloat16),    # (L, FFN, H)
        "lm_w": params["lm_w"].astype(jnp.bfloat16),                            # (H, VOCAB)
        # coalesced small-vector slab
        "slab": slab,                                                           # (R, 128) f32
    }
    return packed


# ----------------------------- model -----------------------------
def bert_embeddings_input(packed, input_ids):
    """Embedding gather + sum in JAX glue; LayerNorm is inside the fused kernel."""
    B, S = input_ids.shape
    we = jnp.take(packed["word_emb"], input_ids, axis=0)            # (B, S, H)
    pe = packed["pos_emb"][:S]                                      # (S, H)
    te = packed["type_emb"][0]                                      # (H,)  token_type_ids = 0
    x = we + pe[None, :, :] + te[None, None, :]
    return x.reshape(B * S, HIDDEN)


def bert_for_generation(packed, input_ids, attention_mask=None, labels=None):
    """Forward of BertForGeneration.  `packed` is the pre-packed (hoisted) weight pytree."""
    B, S = input_ids.shape
    if attention_mask is None:
        attention_mask = jnp.ones((B, S), jnp.float32)
    # HF-style extended additive mask: (1 - mask) * large_negative, lane-friendly (B,1,S).
    mask_bias = ((1.0 - attention_mask.astype(jnp.float32)) * -1e9).reshape(B, 1, S)

    x_emb = bert_embeddings_input(packed, input_ids)                 # (B*S, H)
    logits = bert_forward_fused(packed, x_emb, mask_bias).reshape(B, S, VOCAB)

    if labels is not None:
        # CrossEntropyLoss (mean over tokens, ignore_index=-100) in plain JAX glue.
        flat_logits = logits.reshape(-1, VOCAB)
        flat_labels = labels.reshape(-1)
        lse = jax.nn.logsumexp(flat_logits, axis=-1)
        picked = jnp.take_along_axis(
            flat_logits, jnp.clip(flat_labels, 0, VOCAB - 1)[:, None], axis=-1)[:, 0]
        nll = lse - picked
        valid = (flat_labels != -100).astype(jnp.float32)
        return jnp.sum(nll * valid) / jnp.maximum(jnp.sum(valid), 1.0)
    return logits


# ----------------------------- main -----------------------------
if __name__ == "__main__":
    key = jax.random.PRNGKey(0)
    pkey, ikey = jax.random.split(key)

    params = init_params(pkey)
    packed = pack_params(params)          # hoisted: packed once, reused for every forward
    packed = jax.tree_util.tree_map(jax.block_until_ready, packed)

    input_ids = jax.random.randint(ikey, (BATCH, SEQ), 0, VOCAB, dtype=jnp.int32)
    attention_mask = jnp.ones((BATCH, SEQ), jnp.float32)

    forward = jax.jit(bert_for_generation)
    logits = forward(packed, input_ids, attention_mask)
    logits = jax.block_until_ready(logits)

    assert logits.shape == (BATCH, SEQ, VOCAB)
    assert jnp.all(jnp.isfinite(logits))
    print("KERNEL_OK")
</pallas_src>

<mosaic_0001>
module attributes {stable_mosaic.version = 11 : i64} {
  func.func @_bert_fused_kernel(%arg0: i32, %arg1: memref<8x32xf32, #tpu.memory_space<vmem>>, %arg2: memref<1x1x8xf32, #tpu.memory_space<vmem>>, %arg3: memref<2x32x96xbf16, #tpu.memory_space<vmem>>, %arg4: memref<2x32x32xbf16, #tpu.memory_space<vmem>>, %arg5: memref<2x32x64xbf16, #tpu.memory_space<vmem>>, %arg6: memref<2x64x32xbf16, #tpu.memory_space<vmem>>, %arg7: memref<32x128xbf16, #tpu.memory_space<vmem>>, %arg8: memref<24x128xf32, #tpu.memory_space<vmem>>, %arg9: memref<8x128xf32, #tpu.memory_space<vmem>>, %arg10: memref<8x32xf32, #tpu.memory_space<vmem>>) attributes {dimension_semantics = [#tpu.dimension_semantics<parallel>], iteration_bounds = array<i64: 2>, scalar_prefetch = 0 : i64, scratch_operands = 1 : i64, tpu.core_type = #tpu.core_type<tc>, window_params = [{transform_indices = @transform_0, window_bounds = array<i64: 8, 32>}, {transform_indices = @transform_1, window_bounds = array<i64: 1, 1, 8>}, {pipeline_mode = #tpu.pipeline_mode<synchronous>, transform_indices = @transform_2, window_bounds = array<i64: 2, 32, 96>}, {pipeline_mode = #tpu.pipeline_mode<synchronous>, transform_indices = @transform_3, window_bounds = array<i64: 2, 32, 32>}, {pipeline_mode = #tpu.pipeline_mode<synchronous>, transform_indices = @transform_4, window_bounds = array<i64: 2, 32, 64>}, {pipeline_mode = #tpu.pipeline_mode<synchronous>, transform_indices = @transform_5, window_bounds = array<i64: 2, 64, 32>}, {pipeline_mode = #tpu.pipeline_mode<synchronous>, transform_indices = @transform_6, window_bounds = array<i64: 32, 128>}, {pipeline_mode = #tpu.pipeline_mode<synchronous>, transform_indices = @transform_7, window_bounds = array<i64: 24, 128>}, {transform_indices = @transform_8, window_bounds = array<i64: 8, 128>}]} {
    %c0 = arith.constant 0 : index
    %c0_0 = arith.constant 0 : index
    %0 = vector.load %arg1[%c0, %c0_0] : memref<8x32xf32, #tpu.memory_space<vmem>>, vector<8x32xf32>
    %c0_1 = arith.constant 0 : index
    %c0_2 = arith.constant 0 : index
    %1 = vector.load %arg8[%c0_1, %c0_2] : memref<24x128xf32, #tpu.memory_space<vmem>>, vector<1x32xf32>
    %c1 = arith.constant 1 : index
    %c0_3 = arith.constant 0 : index
    %2 = vector.load %arg8[%c1, %c0_3] : memref<24x128xf32, #tpu.memory_space<vmem>>, vector<1x32xf32>
    %cst = arith.constant dense<0.000000e+00> : vector<8xf32>
    %3 = vector.multi_reduction <add>, %0, %cst [1] : vector<8x32xf32> to vector<8xf32>
    %4 = vector.shape_cast %3 : vector<8xf32> to vector<8x1xf32>
    %cst_4 = arith.constant 3.200000e+01 : f32
    %5 = vector.broadcast %cst_4 : f32 to vector<8x1xf32>
    %6 = arith.divf %4, %5 : vector<8x1xf32>
    %7 = vector.broadcast %6 : vector<8x1xf32> to vector<8x32xf32>
    %8 = arith.subf %0, %7 : vector<8x32xf32>
    %9 = arith.mulf %8, %8 : vector<8x32xf32>
    %cst_5 = arith.constant dense<0.000000e+00> : vector<8xf32>
    %10 = vector.multi_reduction <add>, %9, %cst_5 [1] : vector<8x32xf32> to vector<8xf32>
    %11 = vector.shape_cast %10 : vector<8xf32> to vector<8x1xf32>
    %cst_6 = arith.constant 3.200000e+01 : f32
    %12 = vector.broadcast %cst_6 : f32 to vector<8x1xf32>
    %13 = arith.divf %11, %12 : vector<8x1xf32>
    %14 = vector.broadcast %6 : vector<8x1xf32> to vector<8x32xf32>
    %15 = arith.subf %0, %14 : vector<8x32xf32>
    %cst_7 = arith.constant 9.99999996E-13 : f32
    %16 = vector.broadcast %cst_7 : f32 to vector<8x1xf32>
    %17 = arith.addf %13, %16 : vector<8x1xf32>
    %18 = math.rsqrt %17 : vector<8x1xf32>
    %19 = vector.broadcast %18 : vector<8x1xf32> to vector<8x32xf32>
    %20 = arith.mulf %15, %19 : vector<8x32xf32>
    %21 = vector.broadcast %1 : vector<1x32xf32> to vector<8x32xf32>
    %22 = arith.mulf %20, %21 : vector<8x32xf32>
    %23 = vector.broadcast %2 : vector<1x32xf32> to vector<8x32xf32>
    %24 = arith.addf %22, %23 : vector<8x32xf32>
    %c0_8 = arith.constant 0 : index
    %c0_9 = arith.constant 0 : index
    %c0_10 = arith.constant 0 : index
    %25 = vector.load %arg2[%c0_8, %c0_9, %c0_10] : memref<1x1x8xf32, #tpu.memory_space<vmem>>, vector<1x1x8xf32>
    %26 = vector.shape_cast %25 : vector<1x1x8xf32> to vector<1x8xf32>
    %27 = arith.truncf %24 : vector<8x32xf32> to vector<8x32xbf16>
    %c0_11 = arith.constant 0 : index
    %c0_12 = arith.constant 0 : index
    %c0_13 = arith.constant 0 : index
    %28 = vector.load %arg3[%c0_11, %c0_12, %c0_13] : memref<2x32x96xbf16, #tpu.memory_space<vmem>>, vector<1x32x96xbf16>
    %29 = vector.shape_cast %28 : vector<1x32x96xbf16> to vector<32x96xbf16>
    %cst_14 = arith.constant dense<0.000000e+00> : vector<8x96xf32>
    %30 = tpu.matmul %27, %29, %cst_14 {dimension_numbers = #tpu.dot_dimension_numbers<[1], [0], [0], [1], [0, 0, 1, 1], [], []>} : vector<8x32xbf16>, vector<32x96xbf16>, vector<8x96xf32> -> vector<8x96xf32>
    %c2 = arith.constant 2 : index
    %c0_15 = arith.constant 0 : index
    %31 = vector.load %arg8[%c2, %c0_15] : memref<24x128xf32, #tpu.memory_space<vmem>>, vector<1x96xf32>
    %32 = vector.broadcast %31 : vector<1x96xf32> to vector<8x96xf32>
    %33 = arith.addf %30, %32 : vector<8x96xf32>
    %34 = vector.extract_strided_slice %33 {offsets = [0, 0], sizes = [8, 16], strides = [1, 1]} : vector<8x96xf32> to vector<8x16xf32>
    %35 = vector.extract_strided_slice %33 {offsets = [0, 32], sizes = [8, 16], strides = [1, 1]} : vector<8x96xf32> to vector<8x16xf32>
    %36 = vector.extract_strided_slice %33 {offsets = [0, 64], sizes = [8, 16], strides = [1, 1]} : vector<8x96xf32> to vector<8x16xf32>
    %cst_16 = arith.constant dense<0.000000e+00> : vector<8x8xf32>
    %37 = tpu.matmul %34, %35, %cst_16 {dimension_numbers = #tpu.dot_dimension_numbers<[1], [1], [0], [0], [0, 0, 1, 0], [], []>} : vector<8x16xf32>, vector<8x16xf32>, vector<8x8xf32> -> vector<8x8xf32>
    %cst_17 = arith.constant 2.500000e-01 : f32
    %38 = vector.broadcast %cst_17 : f32 to vector<8x8xf32>
    %39 = arith.mulf %37, %38 : vector<8x8xf32>
    %40 = vector.broadcast %26 : vector<1x8xf32> to vector<8x8xf32>
    %41 = arith.addf %39, %40 : vector<8x8xf32>
    %cst_18 = arith.constant dense<0xFF800000> : vector<8xf32>
    %42 = vector.multi_reduction <maximumf>, %41, %cst_18 [1] : vector<8x8xf32> to vector<8xf32>
    %43 = vector.shape_cast %42 : vector<8xf32> to vector<8x1xf32>
    %44 = vector.broadcast %43 : vector<8x1xf32> to vector<8x8xf32>
    %45 = arith.subf %41, %44 : vector<8x8xf32>
    %46 = math.exp %45 : vector<8x8xf32>
    %cst_19 = arith.constant dense<0.000000e+00> : vector<8xf32>
    %47 = vector.multi_reduction <add>, %46, %cst_19 [1] : vector<8x8xf32> to vector<8xf32>
    %48 = vector.shape_cast %47 : vector<8xf32> to vector<8x1xf32>
    %49 = tpu.reciprocal %48 {approx = true} : vector<8x1xf32> -> vector<8x1xf32>
    %50 = vector.broadcast %49 : vector<8x1xf32> to vector<8x8xf32>
    %51 = arith.mulf %46, %50 : vector<8x8xf32>
    %cst_20 = arith.constant dense<0.000000e+00> : vector<8x16xf32>
    %52 = tpu.matmul %51, %36, %cst_20 {dimension_numbers = #tpu.dot_dimension_numbers<[1], [0], [0], [1], [0, 0, 1, 1], [], []>} : vector<8x8xf32>, vector<8x16xf32>, vector<8x16xf32> -> vector<8x16xf32>
    %c0_21 = arith.constant 0 : index
    %c0_22 = arith.constant 0 : index
    %53 = vector.load %arg10[%c0_21, %c0_22] : memref<8x32xf32, #tpu.memory_space<vmem>>, vector<8x16xf32>
    tpu.vector_store %arg10[%c0_21, %c0_22], %52 {strides = array<i32>} : memref<8x32xf32, #tpu.memory_space<vmem>>, vector<8x16xf32>,
    %54 = vector.extract_strided_slice %33 {offsets = [0, 16], sizes = [8, 16], strides = [1, 1]} : vector<8x96xf32> to vector<8x16xf32>
    %55 = vector.extract_strided_slice %33 {offsets = [0, 48], sizes = [8, 16], strides = [1, 1]} : vector<8x96xf32> to vector<8x16xf32>
    %56 = vector.extract_strided_slice %33 {offsets = [0, 80], sizes = [8, 16], strides = [1, 1]} : vector<8x96xf32> to vector<8x16xf32>
    %cst_23 = arith.constant dense<0.000000e+00> : vector<8x8xf32>
    %57 = tpu.matmul %54, %55, %cst_23 {dimension_numbers = #tpu.dot_dimension_numbers<[1], [1], [0], [0], [0, 0, 1, 0], [], []>} : vector<8x16xf32>, vector<8x16xf32>, vector<8x8xf32> -> vector<8x8xf32>
    %cst_24 = arith.constant 2.500000e-01 : f32
    %58 = vector.broadcast %cst_24 : f32 to vector<8x8xf32>
    %59 = arith.mulf %57, %58 : vector<8x8xf32>
    %60 = vector.broadcast %26 : vector<1x8xf32> to vector<8x8xf32>
    %61 = arith.addf %59, %60 : vector<8x8xf32>
    %cst_25 = arith.constant dense<0xFF800000> : vector<8xf32>
    %62 = vector.multi_reduction <maximumf>, %61, %cst_25 [1] : vector<8x8xf32> to vector<8xf32>
    %63 = vector.shape_cast %62 : vector<8xf32> to vector<8x1xf32>
    %64 = vector.broadcast %63 : vector<8x1xf32> to vector<8x8xf32>
    %65 = arith.subf %61, %64 : vector<8x8xf32>
    %66 = math.exp %65 : vector<8x8xf32>
    %cst_26 = arith.constant dense<0.000000e+00> : vector<8xf32>
    %67 = vector.multi_reduction <add>, %66, %cst_26 [1] : vector<8x8xf32> to vector<8xf32>
    %68 = vector.shape_cast %67 : vector<8xf32> to vector<8x1xf32>
    %69 = tpu.reciprocal %68 {approx = true} : vector<8x1xf32> -> vector<8x1xf32>
    %70 = vector.broadcast %69 : vector<8x1xf32> to vector<8x8xf32>
    %71 = arith.mulf %66, %70 : vector<8x8xf32>
    %cst_27 = arith.constant dense<0.000000e+00> : vector<8x16xf32>
    %72 = tpu.matmul %71, %56, %cst_27 {dimension_numbers = #tpu.dot_dimension_numbers<[1], [0], [0], [1], [0, 0, 1, 1], [], []>} : vector<8x8xf32>, vector<8x16xf32>, vector<8x16xf32> -> vector<8x16xf32>
    %c0_28 = arith.constant 0 : index
    %c16 = arith.constant 16 : index
    %73 = vector.load %arg10[%c0_28, %c16] : memref<8x32xf32, #tpu.memory_space<vmem>>, vector<8x16xf32>
    tpu.vector_store %arg10[%c0_28, %c16], %72 {strides = array<i32>} : memref<8x32xf32, #tpu.memory_space<vmem>>, vector<8x16xf32>,
    %c0_29 = arith.constant 0 : index
    %c0_30 = arith.constant 0 : index
    %74 = vector.load %arg10[%c0_29, %c0_30] : memref<8x32xf32, #tpu.memory_space<vmem>>, vector<8x32xf32>
    %75 = arith.truncf %74 : vector<8x32xf32> to vector<8x32xbf16>
    %c0_31 = arith.constant 0 : index
    %c0_32 = arith.constant 0 : index
    %c0_33 = arith.constant 0 : index
    %76 = vector.load %arg4[%c0_31, %c0_32, %c0_33] : memref<2x32x32xbf16, #tpu.memory_space<vmem>>, vector<1x32x32xbf16>
    %77 = vector.shape_cast %76 : vector<1x32x32xbf16> to vector<32x32xbf16>
    %cst_34 = arith.constant dense<0.000000e+00> : vector<8x32xf32>
    %78 = tpu.matmul %75, %77, %cst_34 {dimension_numbers = #tpu.dot_dimension_numbers<[1], [0], [0], [1], [0, 0, 1, 1], [], []>} : vector<8x32xbf16>, vector<32x32xbf16>, vector<8x32xf32> -> vector<8x32xf32>
    %c3 = arith.constant 3 : index
    %c0_35 = arith.constant 0 : index
    %79 = vector.load %arg8[%c3, %c0_35] : memref<24x128xf32, #tpu.memory_space<vmem>>, vector<1x32xf32>
    %80 = vector.broadcast %79 : vector<1x32xf32> to vector<8x32xf32>
    %81 = arith.addf %78, %80 : vector<8x32xf32>
    %82 = arith.addf %81, %24 : vector<8x32xf32>
    %c4 = arith.constant 4 : index
    %c0_36 = arith.constant 0 : index
    %83 = vector.load %arg8[%c4, %c0_36] : memref<24x128xf32, #tpu.memory_space<vmem>>, vector<1x32xf32>
    %c5 = arith.constant 5 : index
    %c0_37 = arith.constant 0 : index
    %84 = vector.load %arg8[%c5, %c0_37] : memref<24x128xf32, #tpu.memory_space<vmem>>, vector<1x32xf32>
    %cst_38 = arith.constant dense<0.000000e+00> : vector<8xf32>
    %85 = vector.multi_reduction <add>, %82, %cst_38 [1] : vector<8x32xf32> to vector<8xf32>
    %86 = vector.shape_cast %85 : vector<8xf32> to vector<8x1xf32>
    %cst_39 = arith.constant 3.200000e+01 : f32
    %87 = vector.broadcast %cst_39 : f32 to vector<8x1xf32>
    %88 = arith.divf %86, %87 : vector<8x1xf32>
    %89 = vector.broadcast %88 : vector<8x1xf32> to vector<8x32xf32>
    %90 = arith.subf %82, %89 : vector<8x32xf32>
    %91 = arith.mulf %90, %90 : vector<8x32xf32>
    %cst_40 = arith.constant dense<0.000000e+00> : vector<8xf32>
    %92 = vector.multi_reduction <add>, %91, %cst_40 [1] : vector<8x32xf32> to vector<8xf32>
    %93 = vector.shape_cast %92 : vector<8xf32> to vector<8x1xf32>
    %cst_41 = arith.constant 3.200000e+01 : f32
    %94 = vector.broadcast %cst_41 : f32 to vector<8x1xf32>
    %95 = arith.divf %93, %94 : vector<8x1xf32>
    %96 = vector.broadcast %88 : vector<8x1xf32> to vector<8x32xf32>
    %97 = arith.subf %82, %96 : vector<8x32xf32>
    %cst_42 = arith.constant 9.99999996E-13 : f32
    %98 = vector.broadcast %cst_42 : f32 to vector<8x1xf32>
    %99 = arith.addf %95, %98 : vector<8x1xf32>
    %100 = math.rsqrt %99 : vector<8x1xf32>
    %101 = vector.broadcast %100 : vector<8x1xf32> to vector<8x32xf32>
    %102 = arith.mulf %97, %101 : vector<8x32xf32>
    %103 = vector.broadcast %83 : vector<1x32xf32> to vector<8x32xf32>
    %104 = arith.mulf %102, %103 : vector<8x32xf32>
    %105 = vector.broadcast %84 : vector<1x32xf32> to vector<8x32xf32>
    %106 = arith.addf %104, %105 : vector<8x32xf32>
    %107 = arith.truncf %106 : vector<8x32xf32> to vector<8x32xbf16>
    %c0_43 = arith.constant 0 : index
    %c0_44 = arith.constant 0 : index
    %c0_45 = arith.constant 0 : index
    %108 = vector.load %arg5[%c0_43, %c0_44, %c0_45] : memref<2x32x64xbf16, #tpu.memory_space<vmem>>, vector<1x32x64xbf16>
    %109 = vector.shape_cast %108 : vector<1x32x64xbf16> to vector<32x64xbf16>
    %cst_46 = arith.constant dense<0.000000e+00> : vector<8x64xf32>
    %110 = tpu.matmul %107, %109, %cst_46 {dimension_numbers = #tpu.dot_dimension_numbers<[1], [0], [0], [1], [0, 0, 1, 1], [], []>} : vector<8x32xbf16>, vector<32x64xbf16>, vector<8x64xf32> -> vector<8x64xf32>
    %c6 = arith.constant 6 : index
    %c0_47 = arith.constant 0 : index
    %111 = vector.load %arg8[%c6, %c0_47] : memref<24x128xf32, #tpu.memory_space<vmem>>, vector<1x64xf32>
    %112 = vector.broadcast %111 : vector<1x64xf32> to vector<8x64xf32>
    %113 = arith.addf %110, %112 : vector<8x64xf32>
    %cst_48 = arith.constant 5.000000e-01 : f32
    %114 = vector.broadcast %cst_48 : f32 to vector<8x64xf32>
    %115 = arith.mulf %114, %113 : vector<8x64xf32>
    %cst_49 = arith.constant 4.471500e-02 : f32
    %116 = vector.broadcast %cst_49 : f32 to vector<8x64xf32>
    %117 = arith.mulf %116, %113 : vector<8x64xf32>
    %118 = arith.mulf %117, %113 : vector<8x64xf32>
    %119 = arith.mulf %118, %113 : vector<8x64xf32>
    %120 = arith.addf %113, %119 : vector<8x64xf32>
    %cst_50 = arith.constant 0.797884583 : f32
    %121 = vector.broadcast %cst_50 : f32 to vector<8x64xf32>
    %122 = arith.mulf %121, %120 : vector<8x64xf32>
    %123 = math.tanh %122 : vector<8x64xf32>
    %cst_51 = arith.constant 1.000000e+00 : f32
    %124 = vector.broadcast %cst_51 : f32 to vector<8x64xf32>
    %125 = arith.addf %124, %123 : vector<8x64xf32>
    %126 = arith.mulf %115, %125 : vector<8x64xf32>
    %127 = arith.truncf %126 : vector<8x64xf32> to vector<8x64xbf16>
    %c0_52 = arith.constant 0 : index
    %c0_53 = arith.constant 0 : index
    %c0_54 = arith.constant 0 : index
    %128 = vector.load %arg6[%c0_52, %c0_53, %c0_54] : memref<2x64x32xbf16, #tpu.memory_space<vmem>>, vector<1x64x32xbf16>
    %129 = vector.shape_cast %128 : vector<1x64x32xbf16> to vector<64x32xbf16>
    %cst_55 = arith.constant dense<0.000000e+00> : vector<8x32xf32>
    %130 = tpu.matmul %127, %129, %cst_55 {dimension_numbers = #tpu.dot_dimension_numbers<[1], [0], [0], [1], [0, 0, 1, 1], [], []>} : vector<8x64xbf16>, vector<64x32xbf16>, vector<8x32xf32> -> vector<8x32xf32>
    %c7 = arith.constant 7 : index
    %c0_56 = arith.constant 0 : index
    %131 = vector.load %arg8[%c7, %c0_56] : memref<24x128xf32, #tpu.memory_space<vmem>>, vector<1x32xf32>
    %132 = vector.broadcast %131 : vector<1x32xf32> to vector<8x32xf32>
    %133 = arith.addf %130, %132 : vector<8x32xf32>
    %134 = arith.addf %133, %106 : vector<8x32xf32>
    %c8 = arith.constant 8 : index
    %c0_57 = arith.constant 0 : index
    %135 = vector.load %arg8[%c8, %c0_57] : memref<24x128xf32, #tpu.memory_space<vmem>>, vector<1x32xf32>
    %c9 = arith.constant 9 : index
    %c0_58 = arith.constant 0 : index
    %136 = vector.load %arg8[%c9, %c0_58] : memref<24x128xf32, #tpu.memory_space<vmem>>, vector<1x32xf32>
    %cst_59 = arith.constant dense<0.000000e+00> : vector<8xf32>
    %137 = vector.multi_reduction <add>, %134, %cst_59 [1] : vector<8x32xf32> to vector<8xf32>
    %138 = vector.shape_cast %137 : vector<8xf32> to vector<8x1xf32>
    %cst_60 = arith.constant 3.200000e+01 : f32
    %139 = vector.broadcast %cst_60 : f32 to vector<8x1xf32>
    %140 = arith.divf %138, %139 : vector<8x1xf32>
    %141 = vector.broadcast %140 : vector<8x1xf32> to vector<8x32xf32>
    %142 = arith.subf %134, %141 : vector<8x32xf32>
    %143 = arith.mulf %142, %142 : vector<8x32xf32>
    %cst_61 = arith.constant dense<0.000000e+00> : vector<8xf32>
    %144 = vector.multi_reduction <add>, %143, %cst_61 [1] : vector<8x32xf32> to vector<8xf32>
    %145 = vector.shape_cast %144 : vector<8xf32> to vector<8x1xf32>
    %cst_62 = arith.constant 3.200000e+01 : f32
    %146 = vector.broadcast %cst_62 : f32 to vector<8x1xf32>
    %147 = arith.divf %145, %146 : vector<8x1xf32>
    %148 = vector.broadcast %140 : vector<8x1xf32> to vector<8x32xf32>
    %149 = arith.subf %134, %148 : vector<8x32xf32>
    %cst_63 = arith.constant 9.99999996E-13 : f32
    %150 = vector.broadcast %cst_63 : f32 to vector<8x1xf32>
    %151 = arith.addf %147, %150 : vector<8x1xf32>
    %152 = math.rsqrt %151 : vector<8x1xf32>
    %153 = vector.broadcast %152 : vector<8x1xf32> to vector<8x32xf32>
    %154 = arith.mulf %149, %153 : vector<8x32xf32>
    %155 = vector.broadcast %135 : vector<1x32xf32> to vector<8x32xf32>
    %156 = arith.mulf %154, %155 : vector<8x32xf32>
    %157 = vector.broadcast %136 : vector<1x32xf32> to vector<8x32xf32>
    %158 = arith.addf %156, %157 : vector<8x32xf32>
    %159 = arith.truncf %158 : vector<8x32xf32> to vector<8x32xbf16>
    %c1_64 = arith.constant 1 : index
    %c0_65 = arith.constant 0 : index
    %c0_66 = arith.constant 0 : index
    %160 = vector.load %arg3[%c1_64, %c0_65, %c0_66] : memref<2x32x96xbf16, #tpu.memory_space<vmem>>, vector<1x32x96xbf16>
    %161 = vector.shape_cast %160 : vector<1x32x96xbf16> to vector<32x96xbf16>
    %cst_67 = arith.constant dense<0.000000e+00> : vector<8x96xf32>
    %162 = tpu.matmul %159, %161, %cst_67 {dimension_numbers = #tpu.dot_dimension_numbers<[1], [0], [0], [1], [0, 0, 1, 1], [], []>} : vector<8x32xbf16>, vector<32x96xbf16>, vector<8x96xf32> -> vector<8x96xf32>
    %c10 = arith.constant 10 : index
    %c0_68 = arith.constant 0 : index
    %163 = vector.load %arg8[%c10, %c0_68] : memref<24x128xf32, #tpu.memory_space<vmem>>, vector<1x96xf32>
    %164 = vector.broadcast %163 : vector<1x96xf32> to vector<8x96xf32>
    %165 = arith.addf %162, %164 : vector<8x96xf32>
    %166 = vector.extract_strided_slice %165 {offsets = [0, 0], sizes = [8, 16], strides = [1, 1]} : vector<8x96xf32> to vector<8x16xf32>
    %167 = vector.extract_strided_slice %165 {offsets = [0, 32], sizes = [8, 16], strides = [1, 1]} : vector<8x96xf32> to vector<8x16xf32>
    %168 = vector.extract_strided_slice %165 {offsets = [0, 64], sizes = [8, 16], strides = [1, 1]} : vector<8x96xf32> to vector<8x16xf32>
    %cst_69 = arith.constant dense<0.000000e+00> : vector<8x8xf32>
    %169 = tpu.matmul %166, %167, %cst_69 {dimension_numbers = #tpu.dot_dimension_numbers<[1], [1], [0], [0], [0, 0, 1, 0], [], []>} : vector<8x16xf32>, vector<8x16xf32>, vector<8x8xf32> -> vector<8x8xf32>
    %cst_70 = arith.constant 2.500000e-01 : f32
    %170 = vector.broadcast %cst_70 : f32 to vector<8x8xf32>
    %171 = arith.mulf %169, %170 : vector<8x8xf32>
    %172 = vector.broadcast %26 : vector<1x8xf32> to vector<8x8xf32>
    %173 = arith.addf %171, %172 : vector<8x8xf32>
    %cst_71 = arith.constant dense<0xFF800000> : vector<8xf32>
    %174 = vector.multi_reduction <maximumf>, %173, %cst_71 [1] : vector<8x8xf32> to vector<8xf32>
    %175 = vector.shape_cast %174 : vector<8xf32> to vector<8x1xf32>
    %176 = vector.broadcast %175 : vector<8x1xf32> to vector<8x8xf32>
    %177 = arith.subf %173, %176 : vector<8x8xf32>
    %178 = math.exp %177 : vector<8x8xf32>
    %cst_72 = arith.constant dense<0.000000e+00> : vector<8xf32>
    %179 = vector.multi_reduction <add>, %178, %cst_72 [1] : vector<8x8xf32> to vector<8xf32>
    %180 = vector.shape_cast %179 : vector<8xf32> to vector<8x1xf32>
    %181 = tpu.reciprocal %180 {approx = true} : vector<8x1xf32> -> vector<8x1xf32>
    %182 = vector.broadcast %181 : vector<8x1xf32> to vector<8x8xf32>
    %183 = arith.mulf %178, %182 : vector<8x8xf32>
    %cst_73 = arith.constant dense<0.000000e+00> : vector<8x16xf32>
    %184 = tpu.matmul %183, %168, %cst_73 {dimension_numbers = #tpu.dot_dimension_numbers<[1], [0], [0], [1], [0, 0, 1, 1], [], []>} : vector<8x8xf32>, vector<8x16xf32>, vector<8x16xf32> -> vector<8x16xf32>
    %c0_74 = arith.constant 0 : index
    %c0_75 = arith.constant 0 : index
    %185 = vector.load %arg10[%c0_74, %c0_75] : memref<8x32xf32, #tpu.memory_space<vmem>>, vector<8x16xf32>
    tpu.vector_store %arg10[%c0_74, %c0_75], %184 {strides = array<i32>} : memref<8x32xf32, #tpu.memory_space<vmem>>, vector<8x16xf32>,
    %186 = vector.extract_strided_slice %165 {offsets = [0, 16], sizes = [8, 16], strides = [1, 1]} : vector<8x96xf32> to vector<8x16xf32>
    %187 = vector.extract_strided_slice %165 {offsets = [0, 48], sizes = [8, 16], strides = [1, 1]} : vector<8x96xf32> to vector<8x16xf32>
    %188 = vector.extract_strided_slice %165 {offsets = [0, 80], sizes = [8, 16], strides = [1, 1]} : vector<8x96xf32> to vector<8x16xf32>
    %cst_76 = arith.constant dense<0.000000e+00> : vector<8x8xf32>
    %189 = tpu.matmul %186, %187, %cst_76 {dimension_numbers = #tpu.dot_dimension_numbers<[1], [1], [0], [0], [0, 0, 1, 0], [], []>} : vector<8x16xf32>, vector<8x16xf32>, vector<8x8xf32> -> vector<8x8xf32>
    %cst_77 = arith.constant 2.500000e-01 : f32
    %190 = vector.broadcast %cst_77 : f32 to vector<8x8xf32>
    %191 = arith.mulf %189, %190 : vector<8x8xf32>
    %192 = vector.broadcast %26 : vector<1x8xf32> to vector<8x8xf32>
    %193 = arith.addf %191, %192 : vector<8x8xf32>
    %cst_78 = arith.constant dense<0xFF800000> : vector<8xf32>
    %194 = vector.multi_reduction <maximumf>, %193, %cst_78 [1] : vector<8x8xf32> to vector<8xf32>
    %195 = vector.shape_cast %194 : vector<8xf32> to vector<8x1xf32>
    %196 = vector.broadcast %195 : vector<8x1xf32> to vector<8x8xf32>
    %197 = arith.subf %193, %196 : vector<8x8xf32>
    %198 = math.exp %197 : vector<8x8xf32>
    %cst_79 = arith.constant dense<0.000000e+00> : vector<8xf32>
    %199 = vector.multi_reduction <add>, %198, %cst_79 [1] : vector<8x8xf32> to vector<8xf32>
    %200 = vector.shape_cast %199 : vector<8xf32> to vector<8x1xf32>
    %201 = tpu.reciprocal %200 {approx = true} : vector<8x1xf32> -> vector<8x1xf32>
    %202 = vector.broadcast %201 : vector<8x1xf32> to vector<8x8xf32>
    %203 = arith.mulf %198, %202 : vector<8x8xf32>
    %cst_80 = arith.constant dense<0.000000e+00> : vector<8x16xf32>
    %204 = tpu.matmul %203, %188, %cst_80 {dimension_numbers = #tpu.dot_dimension_numbers<[1], [0], [0], [1], [0, 0, 1, 1], [], []>} : vector<8x8xf32>, vector<8x16xf32>, vector<8x16xf32> -> vector<8x16xf32>
    %c0_81 = arith.constant 0 : index
    %c16_82 = arith.constant 16 : index
    %205 = vector.load %arg10[%c0_81, %c16_82] : memref<8x32xf32, #tpu.memory_space<vmem>>, vector<8x16xf32>
    tpu.vector_store %arg10[%c0_81, %c16_82], %204 {strides = array<i32>} : memref<8x32xf32, #tpu.memory_space<vmem>>, vector<8x16xf32>,
    %c0_83 = arith.constant 0 : index
    %c0_84 = arith.constant 0 : index
    %206 = vector.load %arg10[%c0_83, %c0_84] : memref<8x32xf32, #tpu.memory_space<vmem>>, vector<8x32xf32>
    %207 = arith.truncf %206 : vector<8x32xf32> to vector<8x32xbf16>
    %c1_85 = arith.constant 1 : index
    %c0_86 = arith.constant 0 : index
    %c0_87 = arith.constant 0 : index
    %208 = vector.load %arg4[%c1_85, %c0_86, %c0_87] : memref<2x32x32xbf16, #tpu.memory_space<vmem>>, vector<1x32x32xbf16>
    %209 = vector.shape_cast %208 : vector<1x32x32xbf16> to vector<32x32xbf16>
    %cst_88 = arith.constant dense<0.000000e+00> : vector<8x32xf32>
    %210 = tpu.matmul %207, %209, %cst_88 {dimension_numbers = #tpu.dot_dimension_numbers<[1], [0], [0], [1], [0, 0, 1, 1], [], []>} : vector<8x32xbf16>, vector<32x32xbf16>, vector<8x32xf32> -> vector<8x32xf32>
    %c11 = arith.constant 11 : index
    %c0_89 = arith.constant 0 : index
    %211 = vector.load %arg8[%c11, %c0_89] : memref<24x128xf32, #tpu.memory_space<vmem>>, vector<1x32xf32>
    %212 = vector.broadcast %211 : vector<1x32xf32> to vector<8x32xf32>
    %213 = arith.addf %210, %212 : vector<8x32xf32>
    %214 = arith.addf %213, %158 : vector<8x32xf32>
    %c12 = arith.constant 12 : index
    %c0_90 = arith.constant 0 : index
    %215 = vector.load %arg8[%c12, %c0_90] : memref<24x128xf32, #tpu.memory_space<vmem>>, vector<1x32xf32>
    %c13 = arith.constant 13 : index
    %c0_91 = arith.constant 0 : index
    %216 = vector.load %arg8[%c13, %c0_91] : memref<24x128xf32, #tpu.memory_space<vmem>>, vector<1x32xf32>
    %cst_92 = arith.constant dense<0.000000e+00> : vector<8xf32>
    %217 = vector.multi_reduction <add>, %214, %cst_92 [1] : vector<8x32xf32> to vector<8xf32>
    %218 = vector.shape_cast %217 : vector<8xf32> to vector<8x1xf32>
    %cst_93 = arith.constant 3.200000e+01 : f32
    %219 = vector.broadcast %cst_93 : f32 to vector<8x1xf32>
    %220 = arith.divf %218, %219 : vector<8x1xf32>
    %221 = vector.broadcast %220 : vector<8x1xf32> to vector<8x32xf32>
    %222 = arith.subf %214, %221 : vector<8x32xf32>
    %223 = arith.mulf %222, %222 : vector<8x32xf32>
    %cst_94 = arith.constant dense<0.000000e+00> : vector<8xf32>
    %224 = vector.multi_reduction <add>, %223, %cst_94 [1] : vector<8x32xf32> to vector<8xf32>
    %225 = vector.shape_cast %224 : vector<8xf32> to vector<8x1xf32>
    %cst_95 = arith.constant 3.200000e+01 : f32
    %226 = vector.broadcast %cst_95 : f32 to vector<8x1xf32>
    %227 = arith.divf %225, %226 : vector<8x1xf32>
    %228 = vector.broadcast %220 : vector<8x1xf32> to vector<8x32xf32>
    %229 = arith.subf %214, %228 : vector<8x32xf32>
    %cst_96 = arith.constant 9.99999996E-13 : f32
    %230 = vector.broadcast %cst_96 : f32 to vector<8x1xf32>
    %231 = arith.addf %227, %230 : vector<8x1xf32>
    %232 = math.rsqrt %231 : vector<8x1xf32>
    %233 = vector.broadcast %232 : vector<8x1xf32> to vector<8x32xf32>
    %234 = arith.mulf %229, %233 : vector<8x32xf32>
    %235 = vector.broadcast %215 : vector<1x32xf32> to vector<8x32xf32>
    %236 = arith.mulf %234, %235 : vector<8x32xf32>
    %237 = vector.broadcast %216 : vector<1x32xf32> to vector<8x32xf32>
    %238 = arith.addf %236, %237 : vector<8x32xf32>
    %239 = arith.truncf %238 : vector<8x32xf32> to vector<8x32xbf16>
    %c1_97 = arith.constant 1 : index
    %c0_98 = arith.constant 0 : index
    %c0_99 = arith.constant 0 : index
    %240 = vector.load %arg5[%c1_97, %c0_98, %c0_99] : memref<2x32x64xbf16, #tpu.memory_space<vmem>>, vector<1x32x64xbf16>
    %241 = vector.shape_cast %240 : vector<1x32x64xbf16> to vector<32x64xbf16>
    %cst_100 = arith.constant dense<0.000000e+00> : vector<8x64xf32>
    %242 = tpu.matmul %239, %241, %cst_100 {dimension_numbers = #tpu.dot_dimension_numbers<[1], [0], [0], [1], [0, 0, 1, 1], [], []>} : vector<8x32xbf16>, vector<32x64xbf16>, vector<8x64xf32> -> vector<8x64xf32>
    %c14 = arith.constant 14 : index
    %c0_101 = arith.constant 0 : index
    %243 = vector.load %arg8[%c14, %c0_101] : memref<24x128xf32, #tpu.memory_space<vmem>>, vector<1x64xf32>
    %244 = vector.broadcast %243 : vector<1x64xf32> to vector<8x64xf32>
    %245 = arith.addf %242, %244 : vector<8x64xf32>
    %cst_102 = arith.constant 5.000000e-01 : f32
    %246 = vector.broadcast %cst_102 : f32 to vector<8x64xf32>
    %247 = arith.mulf %246, %245 : vector<8x64xf32>
    %cst_103 = arith.constant 4.471500e-02 : f32
    %248 = vector.broadcast %cst_103 : f32 to vector<8x64xf32>
    %249 = arith.mulf %248, %245 : vector<8x64xf32>
    %250 = arith.mulf %249, %245 : vector<8x64xf32>
    %251 = arith.mulf %250, %245 : vector<8x64xf32>
    %252 = arith.addf %245, %251 : vector<8x64xf32>
    %cst_104 = arith.constant 0.797884583 : f32
    %253 = vector.broadcast %cst_104 : f32 to vector<8x64xf32>
    %254 = arith.mulf %253, %252 : vector<8x64xf32>
    %255 = math.tanh %254 : vector<8x64xf32>
    %cst_105 = arith.constant 1.000000e+00 : f32
    %256 = vector.broadcast %cst_105 : f32 to vector<8x64xf32>
    %257 = arith.addf %256, %255 : vector<8x64xf32>
    %258 = arith.mulf %247, %257 : vector<8x64xf32>
    %259 = arith.truncf %258 : vector<8x64xf32> to vector<8x64xbf16>
    %c1_106 = arith.constant 1 : index
    %c0_107 = arith.constant 0 : index
    %c0_108 = arith.constant 0 : index
    %260 = vector.load %arg6[%c1_106, %c0_107, %c0_108] : memref<2x64x32xbf16, #tpu.memory_space<vmem>>, vector<1x64x32xbf16>
    %261 = vector.shape_cast %260 : vector<1x64x32xbf16> to vector<64x32xbf16>
    %cst_109 = arith.constant dense<0.000000e+00> : vector<8x32xf32>
    %262 = tpu.matmul %259, %261, %cst_109 {dimension_numbers = #tpu.dot_dimension_numbers<[1], [0], [0], [1], [0, 0, 1, 1], [], []>} : vector<8x64xbf16>, vector<64x32xbf16>, vector<8x32xf32> -> vector<8x32xf32>
    %c15 = arith.constant 15 : index
    %c0_110 = arith.constant 0 : index
    %263 = vector.load %arg8[%c15, %c0_110] : memref<24x128xf32, #tpu.memory_space<vmem>>, vector<1x32xf32>
    %264 = vector.broadcast %263 : vector<1x32xf32> to vector<8x32xf32>
    %265 = arith.addf %262, %264 : vector<8x32xf32>
    %266 = arith.addf %265, %238 : vector<8x32xf32>
    %c16_111 = arith.constant 16 : index
    %c0_112 = arith.constant 0 : index
    %267 = vector.load %arg8[%c16_111, %c0_112] : memref<24x128xf32, #tpu.memory_space<vmem>>, vector<1x32xf32>
    %c17 = arith.constant 17 : index
    %c0_113 = arith.constant 0 : index
    %268 = vector.load %arg8[%c17, %c0_113] : memref<24x128xf32, #tpu.memory_space<vmem>>, vector<1x32xf32>
    %cst_114 = arith.constant dense<0.000000e+00> : vector<8xf32>
    %269 = vector.multi_reduction <add>, %266, %cst_114 [1] : vector<8x32xf32> to vector<8xf32>
    %270 = vector.shape_cast %269 : vector<8xf32> to vector<8x1xf32>
    %cst_115 = arith.constant 3.200000e+01 : f32
    %271 = vector.broadcast %cst_115 : f32 to vector<8x1xf32>
    %272 = arith.divf %270, %271 : vector<8x1xf32>
    %273 = vector.broadcast %272 : vector<8x1xf32> to vector<8x32xf32>
    %274 = arith.subf %266, %273 : vector<8x32xf32>
    %275 = arith.mulf %274, %274 : vector<8x32xf32>
    %cst_116 = arith.constant dense<0.000000e+00> : vector<8xf32>
    %276 = vector.multi_reduction <add>, %275, %cst_116 [1] : vector<8x32xf32> to vector<8xf32>
    %277 = vector.shape_cast %276 : vector<8xf32> to vector<8x1xf32>
    %cst_117 = arith.constant 3.200000e+01 : f32
    %278 = vector.broadcast %cst_117 : f32 to vector<8x1xf32>
    %279 = arith.divf %277, %278 : vector<8x1xf32>
    %280 = vector.broadcast %272 : vector<8x1xf32> to vector<8x32xf32>
    %281 = arith.subf %266, %280 : vector<8x32xf32>
    %cst_118 = arith.constant 9.99999996E-13 : f32
    %282 = vector.broadcast %cst_118 : f32 to vector<8x1xf32>
    %283 = arith.addf %279, %282 : vector<8x1xf32>
    %284 = math.rsqrt %283 : vector<8x1xf32>
    %285 = vector.broadcast %284 : vector<8x1xf32> to vector<8x32xf32>
    %286 = arith.mulf %281, %285 : vector<8x32xf32>
    %287 = vector.broadcast %267 : vector<1x32xf32> to vector<8x32xf32>
    %288 = arith.mulf %286, %287 : vector<8x32xf32>
    %289 = vector.broadcast %268 : vector<1x32xf32> to vector<8x32xf32>
    %290 = arith.addf %288, %289 : vector<8x32xf32>
    %291 = arith.truncf %290 : vector<8x32xf32> to vector<8x32xbf16>
    %c0_119 = arith.constant 0 : index
    %c0_120 = arith.constant 0 : index
    %292 = vector.load %arg7[%c0_119, %c0_120] : memref<32x128xbf16, #tpu.memory_space<vmem>>, vector<32x128xbf16>
    %cst_121 = arith.constant dense<0.000000e+00> : vector<8x128xf32>
    %293 = tpu.matmul %291, %292, %cst_121 {dimension_numbers = #tpu.dot_dimension_numbers<[1], [0], [0], [1], [0, 0, 1, 1], [], []>} : vector<8x32xbf16>, vector<32x128xbf16>, vector<8x128xf32> -> vector<8x128xf32>
    %c18 = arith.constant 18 : index
    %c0_122 = arith.constant 0 : index
    %294 = vector.load %arg8[%c18, %c0_122] : memref<24x128xf32, #tpu.memory_space<vmem>>, vector<1x128xf32>
    %295 = vector.broadcast %294 : vector<1x128xf32> to vector<8x128xf32>
    %296 = arith.addf %293, %295 : vector<8x128xf32>
    %c0_123 = arith.constant 0 : index
    %c0_124 = arith.constant 0 : index
    %297 = vector.load %arg9[%c0_123, %c0_124] : memref<8x128xf32, #tpu.memory_space<vmem>>, vector<8x128xf32>
    tpu.vector_store %arg9[%c0_123, %c0_124], %296 {strides = array<i32>} : memref<8x128xf32, #tpu.memory_space<vmem>>, vector<8x128xf32>,
    return
  }
  func.func @transform_0(%arg0: i32) -> (i32, i32) {
    %c0_i32 = arith.constant 0 : i32
    %c0_i32_0 = arith.constant 0 : i32
    return %arg0, %c0_i32 : i32, i32
  }
  func.func @transform_1(%arg0: i32) -> (i32, i32, i32) {
    %c0_i32 = arith.constant 0 : i32
    %c0_i32_0 = arith.constant 0 : i32
    %c0_i32_1 = arith.constant 0 : i32
    return %arg0, %c0_i32, %c0_i32_0 : i32, i32, i32
  }
  func.func @transform_2(%arg0: i32) -> (i32, i32, i32) {
    %c0_i32 = arith.constant 0 : i32
    %c0_i32_0 = arith.constant 0 : i32
    %c0_i32_1 = arith.constant 0 : i32
    %c0_i32_2 = arith.constant 0 : i32
    return %c0_i32, %c0_i32_0, %c0_i32_1 : i32, i32, i32
  }
  func.func @transform_3(%arg0: i32) -> (i32, i32, i32) {
    %c0_i32 = arith.constant 0 : i32
    %c0_i32_0 = arith.constant 0 : i32
    %c0_i32_1 = arith.constant 0 : i32
    %c0_i32_2 = arith.constant 0 : i32
    return %c0_i32, %c0_i32_0, %c0_i32_1 : i32, i32, i32
  }
  func.func @transform_4(%arg0: i32) -> (i32, i32, i32) {
    %c0_i32 = arith.constant 0 : i32
    %c0_i32_0 = arith.constant 0 : i32
    %c0_i32_1 = arith.constant 0 : i32
    %c0_i32_2 = arith.constant 0 : i32
    return %c0_i32, %c0_i32_0, %c0_i32_1 : i32, i32, i32
  }
  func.func @transform_5(%arg0: i32) -> (i32, i32, i32) {
    %c0_i32 = arith.constant 0 : i32
    %c0_i32_0 = arith.constant 0 : i32
    %c0_i32_1 = arith.constant 0 : i32
    %c0_i32_2 = arith.constant 0 : i32
    return %c0_i32, %c0_i32_0, %c0_i32_1 : i32, i32, i32
  }
  func.func @transform_6(%arg0: i32) -> (i32, i32) {
    %c0_i32 = arith.constant 0 : i32
    %c0_i32_0 = arith.constant 0 : i32
    %c0_i32_1 = arith.constant 0 : i32
    return %c0_i32, %c0_i32_0 : i32, i32
  }
  func.func @transform_7(%arg0: i32) -> (i32, i32) {
    %c0_i32 = arith.constant 0 : i32
    %c0_i32_0 = arith.constant 0 : i32
    %c0_i32_1 = arith.constant 0 : i32
    return %c0_i32, %c0_i32_0 : i32, i32
  }
  func.func @transform_8(%arg0: i32) -> (i32, i32) {
    %c0_i32 = arith.constant 0 : i32
    %c0_i32_0 = arith.constant 0 : i32
    return %arg0, %c0_i32 : i32, i32
  }
}

</mosaic_0001>

<llo_original>
// kernel: bert_for_generation.1
$region0: #{bert_for_generation.1}
  #allocation0 [shape = 'u32[]', space=smem, size = 0x4, offset = 0x4, fixed_abs, tag = 'smem constant byte address 0x4 - core index']
  #allocation1 [shape = 'u32[72,128]{1,0:T(1,128)}', space=vmem, size = 0x9000, scoped, tag = 'internal scratch']
  #allocation2 [shape = 'f32[8,32]{1,0:T(8,128)}', space=vmem, size = 0x1000, scoped, tag = 'scratch operand']
  %s0 = inlined_call_operand.vmem [shape: f32[16,32], index: 0, kind: input, shape index: {}]
  %s1 = inlined_call_operand.vmem [shape: f32[2,1,8], index: 1, kind: input, shape index: {}]
  %s2 = inlined_call_operand.vmem [shape: bf16[2,32,96], index: 2, kind: input, shape index: {}]
  %s3 = inlined_call_operand.vmem [shape: bf16[2,32,32], index: 3, kind: input, shape index: {}]
  %s4 = inlined_call_operand.vmem [shape: bf16[2,32,64], index: 4, kind: input, shape index: {}]
  %s5 = inlined_call_operand.vmem [shape: bf16[2,64,32], index: 5, kind: input, shape index: {}]
  %s6 = inlined_call_operand.vmem [shape: bf16[32,128], index: 6, kind: input, shape index: {}]
  %s7 = inlined_call_operand.vmem [shape: f32[24,128], index: 7, kind: input, shape index: {}]
  %s8 = inlined_call_operand.hbm [shape: f32[16,128], index: 8, kind: output, shape index: {}]
  %s9 = sld [smem:[#allocation0]]
  $region65: #{bert_for_generation.1} parent=0
    _
  %s11 = ssub.s32 1, %s9
  %s12 = scalar_select 0, %s11, %s9
  $region1: #{bert_for_generation.1} parent=0
    #allocation3 [shape = 'u8[8192]{0}', space=vmem, size = 0x2000, scoped, tag = 'output window, operand 0']
    #allocation4 [shape = 's32[2]{0}', space=sflag, size = 0x8, scoped, tag = 'scoped memory for bert_for_generation.1']
    %13 = vsyncpa [#allocation4], 0
    %s14 = scalar_lea.sflag [#allocation4], 1
    %15 = vsyncpa %s14, 0
    loop: start=0, step=1, limit=4
    $region2: #{bert_for_generation.1} parent=1 // loop_pre_header
      _
    $region3: #{bert_for_generation.1} parent=1 // loop_header
      %s17 = sphi 0, %s21
      %p18 = scmp.ge.s32.totalorder %s17, 4
      %s27 = sphi 0, %s29
      %s30 = sphi 0, %s27
      %s31 = sphi 0, %s30
      %s47 = sphi 0, %s31
      %s53 = sphi 0, %s55
      %s56 = sphi 0, %s53
      %s57 = sphi 0, %s56
      %s73 = sphi 0, %s57
      %s77 = sphi 0, %s77
      %s79 = sphi 0, %s77
      %s80 = sphi 0, %s79
      %s94 = sphi 0, %s80
      %s98 = sphi 0, %s98
      %s100 = sphi 0, %s98
      %s101 = sphi 0, %s100
      %s115 = sphi 0, %s101
      %s119 = sphi 0, %s119
      %s121 = sphi 0, %s119
      %s122 = sphi 0, %s121
      %s136 = sphi 0, %s122
      %s140 = sphi 0, %s140
      %s142 = sphi 0, %s140
      %s143 = sphi 0, %s142
      %s157 = sphi 0, %s143
      %s161 = sphi 0, %s161
      %s163 = sphi 0, %s161
      %s164 = sphi 0, %s163
      %s178 = sphi 0, %s164
      %s182 = sphi 0, %s182
      %s184 = sphi 0, %s182
      %s185 = sphi 0, %s184
      %s199 = sphi 0, %s185
      %s205 = sphi 0, %s207
      %s208 = sphi 0, %s205
      %s209 = sphi 0, %s208
      %s225 = sphi 0, %s209
    $region4: #{bert_for_generation.1} parent=1 // loop_header_branch
      %20 = sbr.rel (%p18) target = $region8
    $region5: #{bert_for_generation.1} parent=1 // loop_body
      %s22 = ssub.s32 %s17, 1
      %s23 = ssub.s32 %s17, 2
      %s24 = sadd.s32 %s17, 1
      %s25 = ssub.s32 %s17, %s24
      %p26 = scmp.eq.s32.totalorder %s25, 0
      %s28 = sadd.s32 %s27, 1
      %s29 = scalar_select %p26, %s27, %s28
      %p32 = pneg %p26
      %p33 = scmp.eq.s32.totalorder %s17, 1
      %p34 = por %p32, %p33
      %p35 = scmp.ne.s32.totalorder %s27, %s30
      %p36 = scmp.eq.s32.totalorder %s17, 0
      %p37 = por %p35, %p36
      %p38 = scmp.ne.s32.totalorder %s27, %s30
      %p39 = scmp.eq.s32.totalorder %s22, 1
      %p40 = por %p38, %p39
      %p41 = scmp.ne.s32.totalorder %s30, %s31
      %p42 = scmp.eq.s32.totalorder %s22, 0
      %p43 = por %p41, %p42
      %p44 = scmp.ne.s32.totalorder %s30, %s31
      %p45 = scmp.eq.s32.totalorder %s23, 1
      %p46 = por %p44, %p45
      %p48 = scmp.ne.s32.totalorder %s31, %s47
      %p49 = scmp.eq.s32.totalorder %s23, 0
      %p50 = por %p48, %p49
      %s51 = ssub.s32 %s17, %s24
      %p52 = scmp.eq.s32.totalorder %s51, 0
      %s54 = sadd.s32 %s53, 1
      %s55 = scalar_select %p52, %s53, %s54
      %p58 = pneg %p52
      %p59 = scmp.eq.s32.totalorder %s17, 1
      %p60 = por %p58, %p59
      %p61 = scmp.ne.s32.totalorder %s53, %s56
      %p62 = scmp.eq.s32.totalorder %s17, 0
      %p63 = por %p61, %p62
      %p64 = scmp.ne.s32.totalorder %s53, %s56
      %p65 = scmp.eq.s32.totalorder %s22, 1
      %p66 = por %p64, %p65
      %p67 = scmp.ne.s32.totalorder %s56, %s57
      %p68 = scmp.eq.s32.totalorder %s22, 0
      %p69 = por %p67, %p68
      %p70 = scmp.ne.s32.totalorder %s56, %s57
      %p71 = scmp.eq.s32.totalorder %s23, 1
      %p72 = por %p70, %p71
      %p74 = scmp.ne.s32.totalorder %s57, %s73
      %p75 = scmp.eq.s32.totalorder %s23, 0
      %p76 = por %p74, %p75
      %s78 = sadd.s32 %s77, 1
      %p81 = scmp.eq.s32.totalorder %s17, 1
      %p82 = scmp.ne.s32.totalorder %s77, %s79
      %p83 = scmp.eq.s32.totalorder %s17, 0
      %p84 = por %p82, %p83
      %p85 = scmp.ne.s32.totalorder %s77, %s79
      %p86 = scmp.eq.s32.totalorder %s22, 1
      %p87 = por %p85, %p86
      %p88 = scmp.ne.s32.totalorder %s79, %s80
      %p89 = scmp.eq.s32.totalorder %s22, 0
      %p90 = por %p88, %p89
      %p91 = scmp.ne.s32.totalorder %s79, %s80
      %p92 = scmp.eq.s32.totalorder %s23, 1
      %p93 = por %p91, %p92
      %p95 = scmp.ne.s32.totalorder %s80, %s94
      %p96 = scmp.eq.s32.totalorder %s23, 0
      %p97 = por %p95, %p96
      %s99 = sadd.s32 %s98, 1
      %p102 = scmp.eq.s32.totalorder %s17, 1
      %p103 = scmp.ne.s32.totalorder %s98, %s100
      %p104 = scmp.eq.s32.totalorder %s17, 0
      %p105 = por %p103, %p104
      %p106 = scmp.ne.s32.totalorder %s98, %s100
      %p107 = scmp.eq.s32.totalorder %s22, 1
      %p108 = por %p106, %p107
      %p109 = scmp.ne.s32.totalorder %s100, %s101
      %p110 = scmp.eq.s32.totalorder %s22, 0
      %p111 = por %p109, %p110
      %p112 = scmp.ne.s32.totalorder %s100, %s101
      %p113 = scmp.eq.s32.totalorder %s23, 1
      %p114 = por %p112, %p113
      %p116 = scmp.ne.s32.totalorder %s101, %s115
      %p117 = scmp.eq.s32.totalorder %s23, 0
      %p118 = por %p116, %p117
      %s120 = sadd.s32 %s119, 1
      %p123 = scmp.eq.s32.totalorder %s17, 1
      %p124 = scmp.ne.s32.totalorder %s119, %s121
      %p125 = scmp.eq.s32.totalorder %s17, 0
      %p126 = por %p124, %p125
      %p127 = scmp.ne.s32.totalorder %s119, %s121
      %p128 = scmp.eq.s32.totalorder %s22, 1
      %p129 = por %p127, %p128
      %p130 = scmp.ne.s32.totalorder %s121, %s122
      %p131 = scmp.eq.s32.totalorder %s22, 0
      %p132 = por %p130, %p131
      %p133 = scmp.ne.s32.totalorder %s121, %s122
      %p134 = scmp.eq.s32.totalorder %s23, 1
      %p135 = por %p133, %p134
      %p137 = scmp.ne.s32.totalorder %s122, %s136
      %p138 = scmp.eq.s32.totalorder %s23, 0
      %p139 = por %p137, %p138
      %s141 = sadd.s32 %s140, 1
      %p144 = scmp.eq.s32.totalorder %s17, 1
      %p145 = scmp.ne.s32.totalorder %s140, %s142
      %p146 = scmp.eq.s32.totalorder %s17, 0
      %p147 = por %p145, %p146
      %p148 = scmp.ne.s32.totalorder %s140, %s142
      %p149 = scmp.eq.s32.totalorder %s22, 1
      %p150 = por %p148, %p149
      %p151 = scmp.ne.s32.totalorder %s142, %s143
      %p152 = scmp.eq.s32.totalorder %s22, 0
      %p153 = por %p151, %p152
      %p154 = scmp.ne.s32.totalorder %s142, %s143
      %p155 = scmp.eq.s32.totalorder %s23, 1
      %p156 = por %p154, %p155
      %p158 = scmp.ne.s32.totalorder %s143, %s157
      %p159 = scmp.eq.s32.totalorder %s23, 0
      %p160 = por %p158, %p159
      %s162 = sadd.s32 %s161, 1
      %p165 = scmp.eq.s32.totalorder %s17, 1
      %p166 = scmp.ne.s32.totalorder %s161, %s163
      %p167 = scmp.eq.s32.totalorder %s17, 0
      %p168 = por %p166, %p167
      %p169 = scmp.ne.s32.totalorder %s161, %s163
      %p170 = scmp.eq.s32.totalorder %s22, 1
      %p171 = por %p169, %p170
      %p172 = scmp.ne.s32.totalorder %s163, %s164
      %p173 = scmp.eq.s32.totalorder %s22, 0
      %p174 = por %p172, %p173
      %p175 = scmp.ne.s32.totalorder %s163, %s164
      %p176 = scmp.eq.s32.totalorder %s23, 1
      %p177 = por %p175, %p176
      %p179 = scmp.ne.s32.totalorder %s164, %s178
      %p180 = scmp.eq.s32.totalorder %s23, 0
      %p181 = por %p179, %p180
      %s183 = sadd.s32 %s182, 1
      %p186 = scmp.eq.s32.totalorder %s17, 1
      %p187 = scmp.ne.s32.totalorder %s182, %s184
      %p188 = scmp.eq.s32.totalorder %s17, 0
      %p189 = por %p187, %p188
      %p190 = scmp.ne.s32.totalorder %s182, %s184
      %p191 = scmp.eq.s32.totalorder %s22, 1
      %p192 = por %p190, %p191
      %p193 = scmp.ne.s32.totalorder %s184, %s185
      %p194 = scmp.eq.s32.totalorder %s22, 0
      %p195 = por %p193, %p194
      %p196 = scmp.ne.s32.totalorder %s184, %s185
      %p197 = scmp.eq.s32.totalorder %s23, 1
      %p198 = por %p196, %p197
      %p200 = scmp.ne.s32.totalorder %s185, %s199
      %p201 = scmp.eq.s32.totalorder %s23, 0
      %p202 = por %p200, %p201
      %s203 = ssub.s32 %s17, %s24
      %p204 = scmp.eq.s32.totalorder %s203, 0
      %s206 = sadd.s32 %s205, 1
      %s207 = scalar_select %p204, %s205, %s206
      %p210 = pneg %p204
      %p211 = scmp.eq.s32.totalorder %s17, 1
      %p212 = por %p210, %p211
      %p213 = scmp.ne.s32.totalorder %s205, %s208
      %p214 = scmp.eq.s32.totalorder %s17, 0
      %p215 = por %p213, %p214
      %p216 = scmp.ne.s32.totalorder %s205, %s208
      %p217 = scmp.eq.s32.totalorder %s22, 1
      %p218 = por %p216, %p217
      %p219 = scmp.ne.s32.totalorder %s208, %s209
      %p220 = scmp.eq.s32.totalorder %s22, 0
      %p221 = por %p219, %p220
      %p222 = scmp.ne.s32.totalorder %s208, %s209
      %p223 = scmp.eq.s32.totalorder %s23, 1
      %p224 = por %p222, %p223
      %p226 = scmp.ne.s32.totalorder %s209, %s225
      %p227 = scmp.eq.s32.totalorder %s23, 0
      %p228 = por %p226, %p227
      %p229 = scmp.le.s32.totalorder 1, %s17
      %p230 = scmp.lt.s32.totalorder %s17, 3
      %p231 = pnand %p229, %p230
      %p232 = pneg %p231
      // Predicated region
      $region9: #{bert_for_generation.1} parent=5 // pred_check
        _
      $region10: #{bert_for_generation.1} parent=5 // pred_check_branch
        %234 = sbr.rel (%p231) target = $region12
      $region11: #{bert_for_generation.1} parent=5 // pred_region
        %s235 = ssub.s32 %s17, 1
        // Predicated region
        $region13: #{bert_for_generation.1} parent=11 // pred_check
          %p236 = pneg %p90
        $region14: #{bert_for_generation.1} parent=11 // pred_check_branch
          %238 = sbr.rel (%p236) target = $region16
        $region15: #{bert_for_generation.1} parent=11 // pred_region
          _
        $region16: #{bert_for_generation.1} parent=11 // pred_fallthru
          _
        // Predicated region
        $region17: #{bert_for_generation.1} parent=11 // pred_check
          %p239 = pneg %p111
        $region18: #{bert_for_generation.1} parent=11 // pred_check_branch
          %241 = sbr.rel (%p239) target = $region20
        $region19: #{bert_for_generation.1} parent=11 // pred_region
          _
        $region20: #{bert_for_generation.1} parent=11 // pred_fallthru
          _
        // Predicated region
        $region21: #{bert_for_generation.1} parent=11 // pred_check
          %p242 = pneg %p132
        $region22: #{bert_for_generation.1} parent=11 // pred_check_branch
          %244 = sbr.rel (%p242) target = $region24
        $region23: #{bert_for_generation.1} parent=11 // pred_region
          _
        $region24: #{bert_for_generation.1} parent=11 // pred_fallthru
          _
        // Predicated region
        $region25: #{bert_for_generation.1} parent=11 // pred_check
          %p245 = pneg %p153
        $region26: #{bert_for_generation.1} parent=11 // pred_check_branch
          %247 = sbr.rel (%p245) target = $region28
        $region27: #{bert_for_generation.1} parent=11 // pred_region
          _
        $region28: #{bert_for_generation.1} parent=11 // pred_fallthru
          _
        // Predicated region
        $region29: #{bert_for_generation.1} parent=11 // pred_check
          %p248 = pneg %p174
        $region30: #{bert_for_generation.1} parent=11 // pred_check_branch
          %250 = sbr.rel (%p248) target = $region32
        $region31: #{bert_for_generation.1} parent=11 // pred_region
          _
        $region32: #{bert_for_generation.1} parent=11 // pred_fallthru
          _
        // Predicated region
        $region33: #{bert_for_generation.1} parent=11 // pred_check
          %p251 = pneg %p195
        $region34: #{bert_for_generation.1} parent=11 // pred_check_branch
          %253 = sbr.rel (%p251) target = $region36
        $region35: #{bert_for_generation.1} parent=11 // pred_region
          _
        $region36: #{bert_for_generation.1} parent=11 // pred_fallthru
          _
      $region12: #{bert_for_generation.1} parent=5 // pred_fallthru
        _
      %p254 = scmp.lt.s32.totalorder %s17, 2
      // Predicated region
      $region37: #{bert_for_generation.1} parent=5 // pred_check
        %p255 = pneg %p254
      $region38: #{bert_for_generation.1} parent=5 // pred_check_branch
        %257 = sbr.rel (%p255) target = $region40
      $region39: #{bert_for_generation.1} parent=5 // pred_region
        // Predicated region
        $region41: #{bert_for_generation.1} parent=39 // pred_check
          %p258 = pneg %p37
        $region42: #{bert_for_generation.1} parent=39 // pred_check_branch
          %260 = sbr.rel (%p258) target = $region44
        $region43: #{bert_for_generation.1} parent=39 // pred_region
          %p261 = scmp.lt.s32.totalorder %s17, 1
          %s262 = scalar_select %p261, %s17, 1
          %s263 = smul.addr %s262, 8
          %s264 = scalar_lea.vmem %s0, %s263
        $region44: #{bert_for_generation.1} parent=39 // pred_fallthru
          _
        // Predicated region
        $region45: #{bert_for_generation.1} parent=39 // pred_check
          %p265 = pneg %p63
        $region46: #{bert_for_generation.1} parent=39 // pred_check_branch
          %267 = sbr.rel (%p265) target = $region48
        $region47: #{bert_for_generation.1} parent=39 // pred_region
          %p268 = scmp.lt.s32.totalorder %s17, 1
          %s269 = scalar_select %p268, %s17, 1
          %s270 = scalar_lea.vmem %s1, %s269
        $region48: #{bert_for_generation.1} parent=39 // pred_fallthru
          _
      $region40: #{bert_for_generation.1} parent=5 // pred_fallthru
        _
      %p271 = scmp.le.s32.totalorder 1, %s17
      %p272 = scmp.lt.s32.totalorder %s17, 3
      %p273 = pnand %p271, %p272
      %p274 = pneg %p273
      // Predicated region
      $region49: #{bert_for_generation.1} parent=5 // pred_check
        _
      $region50: #{bert_for_generation.1} parent=5 // pred_check_branch
        %276 = sbr.rel (%p273) target = $region52
      $region51: #{bert_for_generation.1} parent=5 // pred_region
        %s277 = ssub.s32 %s17, 1
        %p278 = scmp.lt.s32.totalorder %s22, 1
        %s279 = scalar_select %p278, %s22, 1
        %s280 = smul.addr %s279, 8
        %s281 = scalar_lea.vmem %s0, %s280
        %p282 = pneg %p43
        %p283 = pneg %p40
        %p284 = scmp.lt.s32.totalorder %s22, 1
        %s285 = scalar_select %p284, %s22, 1
        %s286 = scalar_lea.vmem %s1, %s285
        %p287 = pneg %p69
        %p288 = pneg %p66
        %p289 = pneg %p90
        %p290 = pneg %p87
        %p291 = pneg %p111
        %p292 = pneg %p108
        %p293 = pneg %p132
        %p294 = pneg %p129
        %p295 = pneg %p153
        %p296 = pneg %p150
        %p297 = pneg %p174
        %p298 = pneg %p171
        %p299 = pneg %p195
        %p300 = pneg %p192
        %p301 = pneg %p221
        %p302 = pneg %p218
        %s303 = sand.u32 %s208, 1
        %s304 = scalar_lea.sflag [#allocation4], %s303
        %s305 = sand.u32 %s208, 1
        %s306 = smul.addr %s305, 8
        %s307 = scalar_lea.vmem [#allocation3], %s306
        %p308 = scmp.lt.s32.totalorder %s22, 1
        %s309 = scalar_select %p308, %s22, 1
        %s310 = smul.addr %s309, 8
        %s311 = scalar_lea.vmem %s0, %s310
        %p312 = scmp.lt.s32.totalorder %s22, 1
        %s313 = scalar_select %p312, %s22, 1
        %s314 = scalar_lea.vmem %s1, %s313
        %v316 = vld [vmem:[%s311] sm:$0xff]
        %v317 = vld [vmem:[%s7] sm:$0x1]
        %v318 = vld [vmem:[%s7 + $0x1] sm:$0x1]
        %vm319 = vcmask 261120
        %v320 = vsel %vm319, %v316, 0.0
        %321 = vadd.xlane.f32.xlu0 %v320
        %v322 = vpop.xlane.xlu0 %321
        %v323 = vrcp.pop 32.0
        %v324 = vmul.f32 32.0, %v323
        %v325 = vsub.f32 1.0, %v324
        %v326 = vmul.f32 %v323, %v325
        %v327 = vadd.f32 %v323, %v326
        %vm328 = vweird.f32 %v323
        %v329 = vsel %vm328, %v323, %v327
        %v330 = vmul.f32 %v322, %v329
        %v331 = vsub.f32 %v316, %v330
        %v332 = vmul.f32 %v331, %v331
        %v333 = vsel %vm319, %v332, 0.0
        %334 = vadd.xlane.f32.xlu0 %v333
        %v335 = vpop.xlane.xlu0 %334
        %v336 = vmul.f32 %v335, %v329
        %v337 = vadd.f32 %v336, 1e-12
        %v338 = vrsqrt.pop %v337
        %v339 = vmul.f32 %v338, %v337
        %v340 = vmul.f32 %v339, %v338
        %v341 = vmul.f32 0.5, %v340
        %v342 = vsub.f32 1.5, %v341
        %v343 = vmul.f32 %v338, %v342
        %vm344 = vweird.f32 %v337
        %vm345 = vweird.f32 %v338
        %vm346 = vmor %vm344, %vm345
        %v347 = vsel %vm346, %v338, %v343
        %v348 = vmul.f32 %v331, %v347
        %v349 = vperm.slane %v317, 0
        %v350 = vmul.f32 %v348, %v349
        %v351 = vperm.slane %v318, 0
        %v352 = vadd.f32 %v350, %v351
        %v353 = vld [vmem:[%s314] sm:$0x1]
        %v354 = vpack.c.bf16 %v352, %v352
        %v355 = vld [vmem:[%s2] sm:$0xf]
        %v356 = vld [vmem:[%s2 + $0x4] sm:$0xf]
        %v357 = vld [vmem:[%s2 + $0x8] sm:$0xf]
        %v358 = vld [vmem:[%s2 + $0xc] sm:$0xf]
        %v359 = vld [vmem:[%s7 + $0x2] sm:$0x1]
        %v360 = vperm.slane %v359, 0
        %v365 = vunpack.c.l.b16 %v355
        %v366 = vunpack.c.l.b16 %v356
        %v367 = vunpack.c.l.b16 %v357
        %v368 = vunpack.c.l.b16 %v358
        %v369 = vpack.c.b16 %v366, %v365
        %v370 = vpack.c.b16 %v368, %v367
        %v374 = vsel %vm319, %v354, 0
        %376 = vmatpush.bf16.msra.mxu0 0
        %377 = vmatpush.bf16.msra.mxu0 0
        %378 = vmatpush.bf16.msra.mxu0 0
        %379 = vmatpush.bf16.msra.mxu0 0
        %380 = vmatpush.bf16.msra.mxu0 0
        %381 = vmatpush.bf16.msra.mxu0 0
        %382 = vmatpush.bf16.msra.mxu0 %v370
        %383 = vmatpush.bf16.msra.mxu0 %v369
        %384 = vmatmul.bf16.gmra.mxu0 %v374
        %v385 = vpop.f32.mrf.mxu0
        %v386 = vadd.f32 %v360, %v385
        %v387 = vpop.f32.mrf.mxu0
        %388 = vdwg.mxu0
        %390 = vrot.lane.b32.xlu0 %v386, 96
        %v391 = vpop.permute.xlu0 %390
        %vm392 = vcmask 130048
        %v393 = vsel %vm392, %v386, 0
        %v395 = vsel %vm392, %v391, 0
        %397 = vmatpush.xpose.msra.mxu0 0.0
        %398 = vmatpush.xpose.msra.mxu0 0.0
        %399 = vmatpush.xpose.msra.mxu0 0.0
        %400 = vmatpush.xpose.msra.mxu0 0.0
        %401 = vmatpush.xpose.msra.mxu0 0.0
        %402 = vmatpush.xpose.msra.mxu0 0.0
        %403 = vmatpush.xpose.msra.mxu0 0.0
        %404 = vmatpush.xpose.msra.mxu0 0.0
        %405 = vmatpush.xpose.msra.mxu0 0.0
        %406 = vmatpush.xpose.msra.mxu0 0.0
        %407 = vmatpush.xpose.msra.mxu0 0.0
        %408 = vmatpush.xpose.msra.mxu0 0.0
        %409 = vmatpush.xpose.msra.mxu0 0.0
        %410 = vmatpush.xpose.msra.mxu0 0.0
        %411 = vmatpush.xpose.msra.mxu0 0.0
        %412 = vmatpush.xpose.msra.mxu0 %v395
        %413 = vmatmul.f32.gmra.mxu0 %v393
        %v414 = vpop.f32.mrf.mxu0
        %v415 = vadd.f32 0.0, %v414
        %416 = vdwg.mxu0
        %v417 = vmul.f32 %v415, 0.25
        %v419 = vperm.slane %v353, 0
        %v421 = vadd.f32 %v417, %v419
        %vm422 = vcmask 64512
        %v423 = vsel %vm422, %v421, -inf
        %424 = vmax.xlane.f32.xlu0 %v423
        %v425 = vpop.xlane.xlu0 %424
        %v426 = vsub.f32 %v421, %v425
        %v427 = vmul.f32 %v426, 1.442695
        %v428 = vpow.pop %v427
        %v429 = vsel %vm422, %v428, 0.0
        %430 = vadd.xlane.f32.xlu0 %v429
        %v431 = vpop.xlane.xlu0 %430
        %v432 = vrcp.pop %v431
        %v433 = vmul.f32 %v428, %v432
        %434 = vrot.lane.b32.xlu0 %v386, 64
        %v435 = vpop.permute.xlu0 %434
        %v438 = vsel %vm422, %v433, 0
        %440 = vmatpush.msra.mxu0 0.0
        %441 = vmatpush.msra.mxu0 0.0
        %442 = vmatpush.msra.mxu0 0.0
        %443 = vmatpush.msra.mxu0 0.0
        %444 = vmatpush.msra.mxu0 0.0
        %445 = vmatpush.msra.mxu0 0.0
        %446 = vmatpush.msra.mxu0 0.0
        %447 = vmatpush.msra.mxu0 0.0
        %448 = vmatpush.msra.mxu0 0.0
        %449 = vmatpush.msra.mxu0 0.0
        %450 = vmatpush.msra.mxu0 0.0
        %451 = vmatpush.msra.mxu0 0.0
        %452 = vmatpush.msra.mxu0 0.0
        %453 = vmatpush.msra.mxu0 0.0
        %454 = vmatpush.msra.mxu0 0.0
        %455 = vmatpush.msra.mxu0 %v435
        %456 = vmatmul.f32.gmra.mxu0 %v438
        %v457 = vpop.f32.mrf.mxu0
        %v458 = vadd.f32 0.0, %v457
        %459 = vdwg.mxu0
        %460 = vst.msk [vmem:[#allocation2] sm:$0xff] %vm392, %v458
        %461 = vrot.lane.b32.xlu0 %v386, 112
        %v462 = vpop.permute.xlu0 %461
        %463 = vrot.lane.b32.xlu0 %v386, 80
        %v464 = vpop.permute.xlu0 %463
        %v465 = vsel %vm392, %v462, 0
        %v467 = vsel %vm392, %v464, 0
        %469 = vmatpush.xpose.msra.mxu0 0.0
        %470 = vmatpush.xpose.msra.mxu0 0.0
        %471 = vmatpush.xpose.msra.mxu0 0.0
        %472 = vmatpush.xpose.msra.mxu0 0.0
        %473 = vmatpush.xpose.msra.mxu0 0.0
        %474 = vmatpush.xpose.msra.mxu0 0.0
        %475 = vmatpush.xpose.msra.mxu0 0.0
        %476 = vmatpush.xpose.msra.mxu0 0.0
        %477 = vmatpush.xpose.msra.mxu0 0.0
        %478 = vmatpush.xpose.msra.mxu0 0.0
        %479 = vmatpush.xpose.msra.mxu0 0.0
        %480 = vmatpush.xpose.msra.mxu0 0.0
        %481 = vmatpush.xpose.msra.mxu0 0.0
        %482 = vmatpush.xpose.msra.mxu0 0.0
        %483 = vmatpush.xpose.msra.mxu0 0.0
        %484 = vmatpush.xpose.msra.mxu0 %v467
        %485 = vmatmul.f32.gmra.mxu0 %v465
        %v486 = vpop.f32.mrf.mxu0
        %v487 = vadd.f32 0.0, %v486
        %488 = vdwg.mxu0
        %v489 = vmul.f32 %v487, 0.25
        %v490 = vadd.f32 %v489, %v419
        %v491 = vsel %vm422, %v490, -inf
        %492 = vmax.xlane.f32.xlu0 %v491
        %v493 = vpop.xlane.xlu0 %492
        %v494 = vsub.f32 %v490, %v493
        %v495 = vmul.f32 %v494, 1.442695
        %v496 = vpow.pop %v495
        %v497 = vsel %vm422, %v496, 0.0
        %498 = vadd.xlane.f32.xlu0 %v497
        %v499 = vpop.xlane.xlu0 %498
        %v500 = vrcp.pop %v499
        %v501 = vmul.f32 %v496, %v500
        %502 = vrot.lane.b32.xlu0 %v386, 48
        %v503 = vpop.permute.xlu0 %502
        %v506 = vsel %vm422, %v501, 0
        %508 = vmatpush.msra.mxu0 0.0
        %509 = vmatpush.msra.mxu0 0.0
        %510 = vmatpush.msra.mxu0 0.0
        %511 = vmatpush.msra.mxu0 0.0
        %512 = vmatpush.msra.mxu0 0.0
        %513 = vmatpush.msra.mxu0 0.0
        %514 = vmatpush.msra.mxu0 0.0
        %515 = vmatpush.msra.mxu0 0.0
        %516 = vmatpush.msra.mxu0 0.0
        %517 = vmatpush.msra.mxu0 0.0
        %518 = vmatpush.msra.mxu0 0.0
        %519 = vmatpush.msra.mxu0 0.0
        %520 = vmatpush.msra.mxu0 0.0
        %521 = vmatpush.msra.mxu0 0.0
        %522 = vmatpush.msra.mxu0 0.0
        %523 = vmatpush.msra.mxu0 %v503
        %524 = vmatmul.f32.gmra.mxu0 %v506
        %v525 = vpop.f32.mrf.mxu0
        %v526 = vadd.f32 0.0, %v525
        %527 = vdwg.mxu0
        %529 = vrot.lane.b32.xlu0 %v526, 16
        %v530 = vpop.permute.xlu0 %529
        %vm532 = vcmask 261248
        %533 = vst.msk [vmem:[#allocation2] sm:$0xff] %vm532, %v530
        %v534 = vld [vmem:[#allocation2] sm:$0xff]
        %v535 = vpack.c.bf16 %v534, %v534
        %v536 = vld [vmem:[%s3] sm:$0xf]
        %v537 = vld [vmem:[%s3 + $0x4] sm:$0xf]
        %v538 = vld [vmem:[%s3 + $0x8] sm:$0xf]
        %v539 = vld [vmem:[%s3 + $0xc] sm:$0xf]
        %v540 = vld [vmem:[%s7 + $0x3] sm:$0x1]
        %v541 = vperm.slane %v540, 0
        %v546 = vunpack.c.l.b16 %v536
        %v547 = vunpack.c.l.b16 %v537
        %v548 = vunpack.c.l.b16 %v538
        %v549 = vunpack.c.l.b16 %v539
        %v550 = vpack.c.b16 %v547, %v546
        %v551 = vpack.c.b16 %v549, %v548
        %v555 = vsel %vm319, %v535, 0
        %557 = vmatpush.bf16.msra.mxu0 0
        %558 = vmatpush.bf16.msra.mxu0 0
        %559 = vmatpush.bf16.msra.mxu0 0
        %560 = vmatpush.bf16.msra.mxu0 0
        %561 = vmatpush.bf16.msra.mxu0 0
        %562 = vmatpush.bf16.msra.mxu0 0
        %563 = vmatpush.bf16.msra.mxu0 %v551
        %564 = vmatpush.bf16.msra.mxu0 %v550
        %565 = vmatmul.bf16.gmra.mxu0 %v555
        %v566 = vpop.f32.mrf.mxu0
        %v567 = vadd.f32 %v541, %v566
        %v568 = vpop.f32.mrf.mxu0
        %569 = vdwg.mxu0
        %v570 = vadd.f32 %v567, %v352
        %v571 = vld [vmem:[%s7 + $0x4] sm:$0x1]
        %v572 = vld [vmem:[%s7 + $0x5] sm:$0x1]
        %v573 = vsel %vm319, %v570, 0.0
        %574 = vadd.xlane.f32.xlu0 %v573
        %v575 = vpop.xlane.xlu0 %574
        %v576 = vmul.f32 %v575, %v329
        %v577 = vsub.f32 %v570, %v576
        %v578 = vmul.f32 %v577, %v577
        %v579 = vsel %vm319, %v578, 0.0
        %580 = vadd.xlane.f32.xlu0 %v579
        %v581 = vpop.xlane.xlu0 %580
        %v582 = vmul.f32 %v581, %v329
        %v583 = vadd.f32 %v582, 1e-12
        %v584 = vrsqrt.pop %v583
        %v585 = vmul.f32 %v584, %v583
        %v586 = vmul.f32 %v585, %v584
        %v587 = vmul.f32 0.5, %v586
        %v588 = vsub.f32 1.5, %v587
        %v589 = vmul.f32 %v584, %v588
        %vm590 = vweird.f32 %v583
        %vm591 = vweird.f32 %v584
        %vm592 = vmor %vm590, %vm591
        %v593 = vsel %vm592, %v584, %v589
        %v594 = vmul.f32 %v577, %v593
        %v595 = vperm.slane %v571, 0
        %v596 = vmul.f32 %v594, %v595
        %v597 = vperm.slane %v572, 0
        %v598 = vadd.f32 %v596, %v597
        %v599 = vpack.c.bf16 %v598, %v598
        %v600 = vld [vmem:[%s4] sm:$0xf]
        %v601 = vld [vmem:[%s4 + $0x4] sm:$0xf]
        %v602 = vld [vmem:[%s4 + $0x8] sm:$0xf]
        %v603 = vld [vmem:[%s4 + $0xc] sm:$0xf]
        %v604 = vld [vmem:[%s7 + $0x6] sm:$0x1]
        %v605 = vperm.slane %v604, 0
        %v610 = vunpack.c.l.b16 %v600
        %v611 = vunpack.c.l.b16 %v601
        %v612 = vunpack.c.l.b16 %v602
        %v613 = vunpack.c.l.b16 %v603
        %v614 = vpack.c.b16 %v611, %v610
        %v615 = vpack.c.b16 %v613, %v612
        %v619 = vsel %vm319, %v599, 0
        %621 = vmatpush.bf16.msra.mxu0 0
        %622 = vmatpush.bf16.msra.mxu0 0
        %623 = vmatpush.bf16.msra.mxu0 0
        %624 = vmatpush.bf16.msra.mxu0 0
        %625 = vmatpush.bf16.msra.mxu0 0
        %626 = vmatpush.bf16.msra.mxu0 0
        %627 = vmatpush.bf16.msra.mxu0 %v615
        %628 = vmatpush.bf16.msra.mxu0 %v614
        %629 = vmatmul.bf16.gmra.mxu0 %v619
        %v630 = vpop.f32.mrf.mxu0
        %v631 = vadd.f32 %v605, %v630
        %v632 = vpop.f32.mrf.mxu0
        %633 = vdwg.mxu0
        %v634 = vmul.f32 %v631, 0.5
        %v635 = vmul.f32 %v631, 0.044715
        %v636 = vmul.f32 %v635, %v631
        %v637 = vmul.f32 %v636, %v631
        %v638 = vadd.f32 %v631, %v637
        %v639 = vmul.f32 %v638, 0.7978846
        %v640 = vtanh.pop %v639
        %v641 = vadd.f32 %v640, 1.0
        %v642 = vmul.f32 %v634, %v641
        %v643 = vpack.c.bf16 %v642, %v642
        %v644 = vld [vmem:[%s5] sm:$0xf]
        %v645 = vld [vmem:[%s5 + $0x4] sm:$0xf]
        %v646 = vld [vmem:[%s5 + $0x8] sm:$0xf]
        %v647 = vld [vmem:[%s5 + $0xc] sm:$0xf]
        %v648 = vld [vmem:[%s5 + $0x10] sm:$0xf]
        %v649 = vld [vmem:[%s5 + $0x14] sm:$0xf]
        %v650 = vld [vmem:[%s5 + $0x18] sm:$0xf]
        %v651 = vld [vmem:[%s5 + $0x1c] sm:$0xf]
        %v652 = vld [vmem:[%s7 + $0x7] sm:$0x1]
        %v653 = vperm.slane %v652, 0
        %v662 = vunpack.c.l.b16 %v644
        %v663 = vunpack.c.l.b16 %v645
        %v664 = vunpack.c.l.b16 %v646
        %v665 = vunpack.c.l.b16 %v647
        %v666 = vunpack.c.l.b16 %v648
        %v667 = vunpack.c.l.b16 %v649
        %v668 = vunpack.c.l.b16 %v650
        %v669 = vunpack.c.l.b16 %v651
        %v670 = vpack.c.b16 %v663, %v662
        %v671 = vpack.c.b16 %v665, %v664
        %v672 = vpack.c.b16 %v667, %v666
        %v673 = vpack.c.b16 %v669, %v668
        %vm678 = vcmask 523264
        %v680 = vsel %vm678, %v643, 0
        %682 = vmatpush.bf16.msra.mxu0 0
        %683 = vmatpush.bf16.msra.mxu0 0
        %684 = vmatpush.bf16.msra.mxu0 0
        %685 = vmatpush.bf16.msra.mxu0 0
        %686 = vmatpush.bf16.msra.mxu0 %v673
        %687 = vmatpush.bf16.msra.mxu0 %v672
        %688 = vmatpush.bf16.msra.mxu0 %v671
        %689 = vmatpush.bf16.msra.mxu0 %v670
        %690 = vmatmul.bf16.gmra.mxu0 %v680
        %v691 = vpop.f32.mrf.mxu0
        %v692 = vadd.f32 %v653, %v691
        %v693 = vpop.f32.mrf.mxu0
        %694 = vdwg.mxu0
        %v695 = vadd.f32 %v692, %v598
        %v696 = vld [vmem:[%s7 + $0x8] sm:$0x1]
        %v697 = vld [vmem:[%s7 + $0x9] sm:$0x1]
        %v698 = vsel %vm319, %v695, 0.0
        %699 = vadd.xlane.f32.xlu0 %v698
        %v700 = vpop.xlane.xlu0 %699
        %v701 = vmul.f32 %v700, %v329
        %v702 = vsub.f32 %v695, %v701
        %v703 = vmul.f32 %v702, %v702
        %v704 = vsel %vm319, %v703, 0.0
        %705 = vadd.xlane.f32.xlu0 %v704
        %v706 = vpop.xlane.xlu0 %705
        %v707 = vmul.f32 %v706, %v329
        %v708 = vadd.f32 %v707, 1e-12
        %v709 = vrsqrt.pop %v708
        %v710 = vmul.f32 %v709, %v708
        %v711 = vmul.f32 %v710, %v709
        %v712 = vmul.f32 0.5, %v711
        %v713 = vsub.f32 1.5, %v712
        %v714 = vmul.f32 %v709, %v713
        %vm715 = vweird.f32 %v708
        %vm716 = vweird.f32 %v709
        %vm717 = vmor %vm715, %vm716
        %v718 = vsel %vm717, %v709, %v714
        %v719 = vmul.f32 %v702, %v718
        %v720 = vperm.slane %v696, 0
        %v721 = vmul.f32 %v719, %v720
        %v722 = vperm.slane %v697, 0
        %v723 = vadd.f32 %v721, %v722
        %v724 = vpack.c.bf16 %v723, %v723
        %s725 = scalar_lea.vmem %s2, 16
        %v726 = vld [vmem:[%s725] sm:$0xf]
        %v727 = vld [vmem:[%s725 + $0x4] sm:$0xf]
        %v728 = vld [vmem:[%s725 + $0x8] sm:$0xf]
        %v729 = vld [vmem:[%s725 + $0xc] sm:$0xf]
        %v730 = vld [vmem:[%s7 + $0xa] sm:$0x1]
        %v731 = vperm.slane %v730, 0
        %v736 = vunpack.c.l.b16 %v726
        %v737 = vunpack.c.l.b16 %v727
        %v738 = vunpack.c.l.b16 %v728
        %v739 = vunpack.c.l.b16 %v729
        %v740 = vpack.c.b16 %v737, %v736
        %v741 = vpack.c.b16 %v739, %v738
        %v745 = vsel %vm319, %v724, 0
        %747 = vmatpush.bf16.msra.mxu0 0
        %748 = vmatpush.bf16.msra.mxu0 0
        %749 = vmatpush.bf16.msra.mxu0 0
        %750 = vmatpush.bf16.msra.mxu0 0
        %751 = vmatpush.bf16.msra.mxu0 0
        %752 = vmatpush.bf16.msra.mxu0 0
        %753 = vmatpush.bf16.msra.mxu0 %v741
        %754 = vmatpush.bf16.msra.mxu0 %v740
        %755 = vmatmul.bf16.gmra.mxu0 %v745
        %v756 = vpop.f32.mrf.mxu0
        %v757 = vadd.f32 %v731, %v756
        %v758 = vpop.f32.mrf.mxu0
        %759 = vdwg.mxu0
        %761 = vrot.lane.b32.xlu0 %v757, 96
        %v762 = vpop.permute.xlu0 %761
        %v763 = vsel %vm392, %v757, 0
        %v765 = vsel %vm392, %v762, 0
        %767 = vmatpush.xpose.msra.mxu0 0.0
        %768 = vmatpush.xpose.msra.mxu0 0.0
        %769 = vmatpush.xpose.msra.mxu0 0.0
        %770 = vmatpush.xpose.msra.mxu0 0.0
        %771 = vmatpush.xpose.msra.mxu0 0.0
        %772 = vmatpush.xpose.msra.mxu0 0.0
        %773 = vmatpush.xpose.msra.mxu0 0.0
        %774 = vmatpush.xpose.msra.mxu0 0.0
        %775 = vmatpush.xpose.msra.mxu0 0.0
        %776 = vmatpush.xpose.msra.mxu0 0.0
        %777 = vmatpush.xpose.msra.mxu0 0.0
        %778 = vmatpush.xpose.msra.mxu0 0.0
        %779 = vmatpush.xpose.msra.mxu0 0.0
        %780 = vmatpush.xpose.msra.mxu0 0.0
        %781 = vmatpush.xpose.msra.mxu0 0.0
        %782 = vmatpush.xpose.msra.mxu0 %v765
        %783 = vmatmul.f32.gmra.mxu0 %v763
        %v784 = vpop.f32.mrf.mxu0
        %v785 = vadd.f32 0.0, %v784
        %786 = vdwg.mxu0
        %v787 = vmul.f32 %v785, 0.25
        %v788 = vadd.f32 %v787, %v419
        %v789 = vsel %vm422, %v788, -inf
        %790 = vmax.xlane.f32.xlu0 %v789
        %v791 = vpop.xlane.xlu0 %790
        %v792 = vsub.f32 %v788, %v791
        %v793 = vmul.f32 %v792, 1.442695
        %v794 = vpow.pop %v793
        %v795 = vsel %vm422, %v794, 0.0
        %796 = vadd.xlane.f32.xlu0 %v795
        %v797 = vpop.xlane.xlu0 %796
        %v798 = vrcp.pop %v797
        %v799 = vmul.f32 %v794, %v798
        %800 = vrot.lane.b32.xlu0 %v757, 64
        %v801 = vpop.permute.xlu0 %800
        %v804 = vsel %vm422, %v799, 0
        %806 = vmatpush.msra.mxu0 0.0
        %807 = vmatpush.msra.mxu0 0.0
        %808 = vmatpush.msra.mxu0 0.0
        %809 = vmatpush.msra.mxu0 0.0
        %810 = vmatpush.msra.mxu0 0.0
        %811 = vmatpush.msra.mxu0 0.0
        %812 = vmatpush.msra.mxu0 0.0
        %813 = vmatpush.msra.mxu0 0.0
        %814 = vmatpush.msra.mxu0 0.0
        %815 = vmatpush.msra.mxu0 0.0
        %816 = vmatpush.msra.mxu0 0.0
        %817 = vmatpush.msra.mxu0 0.0
        %818 = vmatpush.msra.mxu0 0.0
        %819 = vmatpush.msra.mxu0 0.0
        %820 = vmatpush.msra.mxu0 0.0
        %821 = vmatpush.msra.mxu0 %v801
        %822 = vmatmul.f32.gmra.mxu0 %v804
        %v823 = vpop.f32.mrf.mxu0
        %v824 = vadd.f32 0.0, %v823
        %825 = vdwg.mxu0
        %826 = vst.msk [vmem:[#allocation2] sm:$0xff] %vm392, %v824
        %827 = vrot.lane.b32.xlu0 %v757, 112
        %v828 = vpop.permute.xlu0 %827
        %829 = vrot.lane.b32.xlu0 %v757, 80
        %v830 = vpop.permute.xlu0 %829
        %v831 = vsel %vm392, %v828, 0
        %v833 = vsel %vm392, %v830, 0
        %835 = vmatpush.xpose.msra.mxu0 0.0
        %836 = vmatpush.xpose.msra.mxu0 0.0
        %837 = vmatpush.xpose.msra.mxu0 0.0
        %838 = vmatpush.xpose.msra.mxu0 0.0
        %839 = vmatpush.xpose.msra.mxu0 0.0
        %840 = vmatpush.xpose.msra.mxu0 0.0
        %841 = vmatpush.xpose.msra.mxu0 0.0
        %842 = vmatpush.xpose.msra.mxu0 0.0
        %843 = vmatpush.xpose.msra.mxu0 0.0
        %844 = vmatpush.xpose.msra.mxu0 0.0
        %845 = vmatpush.xpose.msra.mxu0 0.0
        %846 = vmatpush.xpose.msra.mxu0 0.0
        %847 = vmatpush.xpose.msra.mxu0 0.0
        %848 = vmatpush.xpose.msra.mxu0 0.0
        %849 = vmatpush.xpose.msra.mxu0 0.0
        %850 = vmatpush.xpose.msra.mxu0 %v833
        %851 = vmatmul.f32.gmra.mxu0 %v831
        %v852 = vpop.f32.mrf.mxu0
        %v853 = vadd.f32 0.0, %v852
        %854 = vdwg.mxu0
        %v855 = vmul.f32 %v853, 0.25
        %v856 = vadd.f32 %v855, %v419
        %v857 = vsel %vm422, %v856, -inf
        %858 = vmax.xlane.f32.xlu0 %v857
        %v859 = vpop.xlane.xlu0 %858
        %v860 = vsub.f32 %v856, %v859
        %v861 = vmul.f32 %v860, 1.442695
        %v862 = vpow.pop %v861
        %v863 = vsel %vm422, %v862, 0.0
        %864 = vadd.xlane.f32.xlu0 %v863
        %v865 = vpop.xlane.xlu0 %864
        %v866 = vrcp.pop %v865
        %v867 = vmul.f32 %v862, %v866
        %868 = vrot.lane.b32.xlu0 %v757, 48
        %v869 = vpop.permute.xlu0 %868
        %v872 = vsel %vm422, %v867, 0
        %874 = vmatpush.msra.mxu0 0.0
        %875 = vmatpush.msra.mxu0 0.0
        %876 = vmatpush.msra.mxu0 0.0
        %877 = vmatpush.msra.mxu0 0.0
        %878 = vmatpush.msra.mxu0 0.0
        %879 = vmatpush.msra.mxu0 0.0
        %880 = vmatpush.msra.mxu0 0.0
        %881 = vmatpush.msra.mxu0 0.0
        %882 = vmatpush.msra.mxu0 0.0
        %883 = vmatpush.msra.mxu0 0.0
        %884 = vmatpush.msra.mxu0 0.0
        %885 = vmatpush.msra.mxu0 0.0
        %886 = vmatpush.msra.mxu0 0.0
        %887 = vmatpush.msra.mxu0 0.0
        %888 = vmatpush.msra.mxu0 0.0
        %889 = vmatpush.msra.mxu0 %v869
        %890 = vmatmul.f32.gmra.mxu0 %v872
        %v891 = vpop.f32.mrf.mxu0
        %v892 = vadd.f32 0.0, %v891
        %893 = vdwg.mxu0
        %895 = vrot.lane.b32.xlu0 %v892, 16
        %v896 = vpop.permute.xlu0 %895
        %898 = vst.msk [vmem:[#allocation2] sm:$0xff] %vm532, %v896
        %v899 = vld [vmem:[#allocation2] sm:$0xff]
        %v900 = vpack.c.bf16 %v899, %v899
        %s901 = scalar_lea.vmem %s3, 16
        %v902 = vld [vmem:[%s901] sm:$0xf]
        %v903 = vld [vmem:[%s901 + $0x4] sm:$0xf]
        %v904 = vld [vmem:[%s901 + $0x8] sm:$0xf]
        %v905 = vld [vmem:[%s901 + $0xc] sm:$0xf]
        %v906 = vld [vmem:[%s7 + $0xb] sm:$0x1]
        %v907 = vperm.slane %v906, 0
        %v912 = vunpack.c.l.b16 %v902
        %v913 = vunpack.c.l.b16 %v903
        %v914 = vunpack.c.l.b16 %v904
        %v915 = vunpack.c.l.b16 %v905
        %v916 = vpack.c.b16 %v913, %v912
        %v917 = vpack.c.b16 %v915, %v914
        %v921 = vsel %vm319, %v900, 0
        %923 = vmatpush.bf16.msra.mxu0 0
        %924 = vmatpush.bf16.msra.mxu0 0
        %925 = vmatpush.bf16.msra.mxu0 0
        %926 = vmatpush.bf16.msra.mxu0 0
        %927 = vmatpush.bf16.msra.mxu0 0
        %928 = vmatpush.bf16.msra.mxu0 0
        %929 = vmatpush.bf16.msra.mxu0 %v917
        %930 = vmatpush.bf16.msra.mxu0 %v916
        %931 = vmatmul.bf16.gmra.mxu0 %v921
        %v932 = vpop.f32.mrf.mxu0
        %v933 = vadd.f32 %v907, %v932
        %v934 = vpop.f32.mrf.mxu0
        %935 = vdwg.mxu0
        %v936 = vadd.f32 %v933, %v723
        %v937 = vld [vmem:[%s7 + $0xc] sm:$0x1]
        %v938 = vld [vmem:[%s7 + $0xd] sm:$0x1]
        %v939 = vsel %vm319, %v936, 0.0
        %940 = vadd.xlane.f32.xlu0 %v939
        %v941 = vpop.xlane.xlu0 %940
        %v942 = vmul.f32 %v941, %v329
        %v943 = vsub.f32 %v936, %v942
        %v944 = vmul.f32 %v943, %v943
        %v945 = vsel %vm319, %v944, 0.0
        %946 = vadd.xlane.f32.xlu0 %v945
        %v947 = vpop.xlane.xlu0 %946
        %v948 = vmul.f32 %v947, %v329
        %v949 = vadd.f32 %v948, 1e-12
        %v950 = vrsqrt.pop %v949
        %v951 = vmul.f32 %v950, %v949
        %v952 = vmul.f32 %v951, %v950
        %v953 = vmul.f32 0.5, %v952
        %v954 = vsub.f32 1.5, %v953
        %v955 = vmul.f32 %v950, %v954
        %vm956 = vweird.f32 %v949
        %vm957 = vweird.f32 %v950
        %vm958 = vmor %vm956, %vm957
        %v959 = vsel %vm958, %v950, %v955
        %v960 = vmul.f32 %v943, %v959
        %v961 = vperm.slane %v937, 0
        %v962 = vmul.f32 %v960, %v961
        %v963 = vperm.slane %v938, 0
        %v964 = vadd.f32 %v962, %v963
        %v965 = vpack.c.bf16 %v964, %v964
        %s966 = scalar_lea.vmem %s4, 16
        %v967 = vld [vmem:[%s966] sm:$0xf]
        %v968 = vld [vmem:[%s966 + $0x4] sm:$0xf]
        %v969 = vld [vmem:[%s966 + $0x8] sm:$0xf]
        %v970 = vld [vmem:[%s966 + $0xc] sm:$0xf]
        %v971 = vld [vmem:[%s7 + $0xe] sm:$0x1]
        %v972 = vperm.slane %v971, 0
        %v977 = vunpack.c.l.b16 %v967
        %v978 = vunpack.c.l.b16 %v968
        %v979 = vunpack.c.l.b16 %v969
        %v980 = vunpack.c.l.b16 %v970
        %v981 = vpack.c.b16 %v978, %v977
        %v982 = vpack.c.b16 %v980, %v979
        %v986 = vsel %vm319, %v965, 0
        %988 = vmatpush.bf16.msra.mxu0 0
        %989 = vmatpush.bf16.msra.mxu0 0
        %990 = vmatpush.bf16.msra.mxu0 0
        %991 = vmatpush.bf16.msra.mxu0 0
        %992 = vmatpush.bf16.msra.mxu0 0
        %993 = vmatpush.bf16.msra.mxu0 0
        %994 = vmatpush.bf16.msra.mxu0 %v982
        %995 = vmatpush.bf16.msra.mxu0 %v981
        %996 = vmatmul.bf16.gmra.mxu0 %v986
        %v997 = vpop.f32.mrf.mxu0
        %v998 = vadd.f32 %v972, %v997
        %v999 = vpop.f32.mrf.mxu0
        %1000 = vdwg.mxu0
        %v1001 = vmul.f32 %v998, 0.5
        %v1002 = vmul.f32 %v998, 0.044715
        %v1003 = vmul.f32 %v1002, %v998
        %v1004 = vmul.f32 %v1003, %v998
        %v1005 = vadd.f32 %v998, %v1004
        %v1006 = vmul.f32 %v1005, 0.7978846
        %v1007 = vtanh.pop %v1006
        %v1008 = vadd.f32 %v1007, 1.0
        %v1009 = vmul.f32 %v1001, %v1008
        %v1010 = vpack.c.bf16 %v1009, %v1009
        %s1011 = scalar_lea.vmem %s5, 32
        %v1012 = vld [vmem:[%s1011] sm:$0xf]
        %v1013 = vld [vmem:[%s1011 + $0x4] sm:$0xf]
        %v1014 = vld [vmem:[%s1011 + $0x8] sm:$0xf]
        %v1015 = vld [vmem:[%s1011 + $0xc] sm:$0xf]
        %v1016 = vld [vmem:[%s1011 + $0x10] sm:$0xf]
        %v1017 = vld [vmem:[%s1011 + $0x14] sm:$0xf]
        %v1018 = vld [vmem:[%s1011 + $0x18] sm:$0xf]
        %v1019 = vld [vmem:[%s1011 + $0x1c] sm:$0xf]
        %v1020 = vld [vmem:[%s7 + $0xf] sm:$0x1]
        %v1021 = vperm.slane %v1020, 0
        %v1030 = vunpack.c.l.b16 %v1012
        %v1031 = vunpack.c.l.b16 %v1013
        %v1032 = vunpack.c.l.b16 %v1014
        %v1033 = vunpack.c.l.b16 %v1015
        %v1034 = vunpack.c.l.b16 %v1016
        %v1035 = vunpack.c.l.b16 %v1017
        %v1036 = vunpack.c.l.b16 %v1018
        %v1037 = vunpack.c.l.b16 %v1019
        %v1038 = vpack.c.b16 %v1031, %v1030
        %v1039 = vpack.c.b16 %v1033, %v1032
        %v1040 = vpack.c.b16 %v1035, %v1034
        %v1041 = vpack.c.b16 %v1037, %v1036
        %v1047 = vsel %vm678, %v1010, 0
        %1049 = vmatpush.bf16.msra.mxu0 0
        %1050 = vmatpush.bf16.msra.mxu0 0
        %1051 = vmatpush.bf16.msra.mxu0 0
        %1052 = vmatpush.bf16.msra.mxu0 0
        %1053 = vmatpush.bf16.msra.mxu0 %v1041
        %1054 = vmatpush.bf16.msra.mxu0 %v1040
        %1055 = vmatpush.bf16.msra.mxu0 %v1039
        %1056 = vmatpush.bf16.msra.mxu0 %v1038
        %1057 = vmatmul.bf16.gmra.mxu0 %v1047
        %v1058 = vpop.f32.mrf.mxu0
        %v1059 = vadd.f32 %v1021, %v1058
        %v1060 = vpop.f32.mrf.mxu0
        %1061 = vdwg.mxu0
        %v1062 = vadd.f32 %v1059, %v964
        %v1063 = vld [vmem:[%s7 + $0x10] sm:$0x1]
        %v1064 = vld [vmem:[%s7 + $0x11] sm:$0x1]
        %v1065 = vsel %vm319, %v1062, 0.0
        %1066 = vadd.xlane.f32.xlu0 %v1065
        %v1067 = vpop.xlane.xlu0 %1066
        %v1068 = vmul.f32 %v1067, %v329
        %v1069 = vsub.f32 %v1062, %v1068
        %v1070 = vmul.f32 %v1069, %v1069
        %v1071 = vsel %vm319, %v1070, 0.0
        %1072 = vadd.xlane.f32.xlu0 %v1071
        %v1073 = vpop.xlane.xlu0 %1072
        %v1074 = vmul.f32 %v1073, %v329
        %v1075 = vadd.f32 %v1074, 1e-12
        %v1076 = vrsqrt.pop %v1075
        %v1077 = vmul.f32 %v1076, %v1075
        %v1078 = vmul.f32 %v1077, %v1076
        %v1079 = vmul.f32 0.5, %v1078
        %v1080 = vsub.f32 1.5, %v1079
        %v1081 = vmul.f32 %v1076, %v1080
        %vm1082 = vweird.f32 %v1075
        %vm1083 = vweird.f32 %v1076
        %vm1084 = vmor %vm1082, %vm1083
        %v1085 = vsel %vm1084, %v1076, %v1081
        %v1086 = vmul.f32 %v1069, %v1085
        %v1087 = vperm.slane %v1063, 0
        %v1088 = vmul.f32 %v1086, %v1087
        %v1089 = vperm.slane %v1064, 0
        %v1090 = vadd.f32 %v1088, %v1089
        %v1091 = vpack.c.bf16 %v1090, %v1090
        %v1092 = vld [vmem:[%s6] sm:$0xf]
        %v1093 = vld [vmem:[%s6 + $0x4] sm:$0xf]
        %v1094 = vld [vmem:[%s6 + $0x8] sm:$0xf]
        %v1095 = vld [vmem:[%s6 + $0xc] sm:$0xf]
        %v1096 = vld [vmem:[%s7 + $0x12] sm:$0x1]
        %v1097 = vperm.slane %v1096, 0
        %v1102 = vunpack.c.l.b16 %v1092
        %v1103 = vunpack.c.l.b16 %v1093
        %v1104 = vunpack.c.l.b16 %v1094
        %v1105 = vunpack.c.l.b16 %v1095
        %v1106 = vpack.c.b16 %v1103, %v1102
        %v1107 = vpack.c.b16 %v1105, %v1104
        %v1111 = vsel %vm319, %v1091, 0
        %1113 = vmatpush.bf16.msra.mxu0 0
        %1114 = vmatpush.bf16.msra.mxu0 0
        %1115 = vmatpush.bf16.msra.mxu0 0
        %1116 = vmatpush.bf16.msra.mxu0 0
        %1117 = vmatpush.bf16.msra.mxu0 0
        %1118 = vmatpush.bf16.msra.mxu0 0
        %1119 = vmatpush.bf16.msra.mxu0 %v1107
        %1120 = vmatpush.bf16.msra.mxu0 %v1106
        %1121 = vmatmul.bf16.gmra.mxu0 %v1111
        %v1122 = vpop.f32.mrf.mxu0
        %v1123 = vadd.f32 %v1097, %v1122
        %v1124 = vpop.f32.mrf.mxu0
        %1125 = vdwg.mxu0
        %1126 = vst [vmem:[%s307] sm:$0xff] %v1123
        %s1127 = sand.u32 %s208, 1
        %s1128 = scalar_lea.sflag [#allocation4], %s1127
        %s1129 = sand.u32 %s208, 1
        %s1130 = smul.addr %s1129, 8
        %s1131 = scalar_lea.vmem [#allocation3], %s1130
        // Predicated region
        $region53: #{bert_for_generation.1} parent=51 // pred_check
          %p1132 = pneg %p218
        $region54: #{bert_for_generation.1} parent=51 // pred_check_branch
          %1134 = sbr.rel (%p1132) target = $region56
        $region55: #{bert_for_generation.1} parent=51 // pred_region
          %1136 = vsyncadd %s1128, 0
          %s1137 = smul.addr %s22, 8
          %s1138 = scalar_lea.hbm %s8, %s1137
          %s1140 = sshll.u32 %s1131, 4
          %s1141 = int_to_ptr.vmem [resolvable:$true] %s1140
          %s1142 = sshll.u32 %s1138, 4
          %s1143 = int_to_ptr.hbm [resolvable:$true] %s1142
          %1145 = dma.vmem_to_hbm [thread:$0]  %s1141, 128, %s1143, %s1128
        $region56: #{bert_for_generation.1} parent=51 // pred_fallthru
          _
      $region52: #{bert_for_generation.1} parent=5 // pred_fallthru
        _
      %p1146 = scmp.le.s32.totalorder 2, %s17
      // Predicated region
      $region57: #{bert_for_generation.1} parent=5 // pred_check
        %p1147 = pneg %p1146
      $region58: #{bert_for_generation.1} parent=5 // pred_check_branch
        %1149 = sbr.rel (%p1147) target = $region60
      $region59: #{bert_for_generation.1} parent=5 // pred_region
        %s1150 = ssub.s32 %s17, 2
        // Predicated region
        $region61: #{bert_for_generation.1} parent=59 // pred_check
          %p1151 = pneg %p224
        $region62: #{bert_for_generation.1} parent=59 // pred_check_branch
          %1153 = sbr.rel (%p1151) target = $region64
        $region63: #{bert_for_generation.1} parent=59 // pred_region
          %s1154 = sand.u32 %s209, 1
          %s1155 = scalar_lea.sflag [#allocation4], %s1154
          %s1156 = sand.u32 %s209, 1
          %s1157 = smul.addr %s1156, 8
          %s1158 = scalar_lea.vmem [#allocation3], %s1157
          %1160 = dma.done %s1155, 128
        $region64: #{bert_for_generation.1} parent=59 // pred_fallthru
          _
      $region60: #{bert_for_generation.1} parent=5 // pred_fallthru
        _
    $region6: #{bert_for_generation.1} parent=1 // loop_footer
      %s21 = sadd.s32 1, %s17
    $region7: #{bert_for_generation.1} parent=1 // loop_footer_branch
      %16 = sbr.rel target = $region3
    $region8: #{bert_for_generation.1} parent=1 // loop_exit
      _
    %1161 = vsyncpa [#allocation4], 1
    %s1162 = scalar_lea.sflag [#allocation4], 1
    %1163 = vsyncpa %s1162, 1

</llo_original>
